<compile_context>
chip_gen: v7x
topology: tpu7x:2x2x1
jax: 0.10.0
libtpu: 0.0.40
codegen_flags: <defaults>
</compile_context>

<pallas_src>
import functools

import jax
import jax.numpy as jnp
from jax import lax
from jax.experimental import pallas as pl
from jax.experimental.pallas import tpu as pltpu


def _lstm_kernel(x_ref, wih_ref, whh_ref, b_ref, fcw_ref, fcb_ref,
                 out_ref, gx_ref, h_ref, c_ref, *,
                 seq_len, chunk_len, bf16_act, unroll):
    chunk = pl.program_id(0)
    n_chunks = pl.num_programs(0)
    bp, hp = h_ref.shape           # padded batch, padded hidden
    tc = chunk_len                 # timesteps per chunk (static)

    @pl.when(chunk == 0)
    def _():
        h_ref[...] = jnp.zeros_like(h_ref)
        c_ref[...] = jnp.zeros_like(c_ref)

    # ---- Hoisted input projection: one big MXU matmul for the whole chunk ----
    # x_ref is already bf16 (cast in the wrapper); result (tc*bp, 4*hp) f32 + bias.
    gx_ref[...] = (jnp.dot(x_ref[...], wih_ref[...],
                           preferred_element_type=jnp.float32)
                   + b_ref[...]).astype(gx_ref.dtype)

    w_hh = whh_ref[...]            # (hp, 4*hp) bf16, loop invariant
    act_dtype = jnp.bfloat16 if bf16_act else jnp.float32
    masked = (seq_len % chunk_len) != 0   # ragged last chunk -> mask state update

    def step(t, carry):
        h, c = carry
        row = pl.multiple_of(t * bp, 8)
        gates = gx_ref[pl.ds(row, bp), :] + jnp.dot(
            h.astype(jnp.bfloat16), w_hh, preferred_element_type=jnp.float32)
        ga = gates.astype(act_dtype)
        # gate order (i, f, o, g): one EUP slab over 3*hp lanes + one tanh.
        # sigmoid(x) = 0.5*tanh(0.5*x) + 0.5 -> a single EUP push per vreg.
        sg = 0.5 * jnp.tanh(0.5 * ga[:, :3 * hp]) + 0.5
        g = jnp.tanh(ga[:, 3 * hp:]).astype(jnp.float32)
        i = sg[:, :hp].astype(jnp.float32)
        f = sg[:, hp:2 * hp].astype(jnp.float32)
        o = sg[:, 2 * hp:3 * hp].astype(jnp.float32)
        c_new = f * c + i * g
        h_new = o * jnp.tanh(c_new.astype(act_dtype)).astype(jnp.float32)
        if masked:
            valid = (chunk * tc + t) < seq_len
            c_new = jnp.where(valid, c_new, c)
            h_new = jnp.where(valid, h_new, h)
        return h_new, c_new

    # Static trip count on every chunk; unrolled so the LLO scheduler can
    # overlap the gx slice load / activations of step t with the MXU work.
    h, c = lax.fori_loop(0, tc, step, (h_ref[...], c_ref[...]), unroll=unroll)
    h_ref[...] = h
    c_ref[...] = c

    @pl.when(chunk == n_chunks - 1)
    def _():
        # Dropout = identity (eval).  fc + softmax on the last hidden state.
        logits = (jnp.dot(h.astype(jnp.bfloat16), fcw_ref[...],
                          preferred_element_type=jnp.float32)
                  + fcb_ref[...])
        m = jnp.max(logits, axis=1, keepdims=True)
        e = jnp.exp(logits - m)
        inv = pl.reciprocal(jnp.sum(e, axis=1, keepdims=True), approx=True)
        out_ref[...] = e * inv


def _round_up(x, m):
    return (x + m - 1) // m * m


@functools.partial(jax.jit, static_argnames=("hidden_size", "num_classes"))
def lstm_forward(x, params, *, hidden_size, num_classes):
    """x: (B, T, F) float32 (or (B, F), which becomes (B, 1, F))."""
    if x.ndim == 2:
        x = x[:, None, :]
    assert x.ndim == 3, f"Input must have 3 dimensions, got {x.shape}"
    B, T, F = x.shape
    H, C = hidden_size, num_classes
    Hp = _round_up(H, 128)
    Fp = _round_up(F, 128)
    Cp = _round_up(C, 128)
    Bp = _round_up(B, 8)

    w_ih, w_hh, b_ih, b_hh, fc_w, fc_b = params

    # ---- Per-generation VMEM budgeting & feature gating (trace-time) --------
    kind = jax.devices()[0].device_kind.lower()
    is_v7 = "7" in kind                               # e.g. "tpu7x"
    use_bf16_act = is_v7 or ("v6" in kind)            # bf16 EUP/VPU: v6e / v7x only
    budget = (40 if is_v7 else 56) * 1024 * 1024      # working-set target
    vmem_limit = (48 if is_v7 else 64) * 1024 * 1024  # > per-gen scoped defaults

    # Resident VMEM: pipelined weight/output buffers (count 2x), h/c state, slack.
    fixed = 2 * (Fp * 4 * Hp * 2 + Hp * 4 * Hp * 2 + 4 * Hp * 4
                 + Hp * Cp * 2 + Cp * 4 + Bp * Cp * 4)
    fixed += 2 * Bp * Hp * 4 + 2 * 1024 * 1024
    # Per-timestep bytes: double-buffered bf16 x chunk + f32 gx scratch.
    per_step = Bp * (2 * Fp * 2 + 4 * Hp * 4)
    tc_cap = int(max(1, min((budget - fixed) // per_step, 512)))

    if T <= tc_cap:
        tc = T
    else:
        # Prefer a chunk that divides T: fully static, unmasked inner loop.
        tc = next((d for d in range(tc_cap, max(tc_cap // 2, 1) - 1, -1)
                   if T % d == 0), tc_cap)
    n_chunks = -(-T // tc)
    unroll = next(u for u in (8, 4, 2, 1) if tc % u == 0)

    def reorder_pad_gates(w, k_pad):
        # w: (4H, K) with PyTorch gate order rows [i; f; g; o].
        # Returns (K_pad, 4*Hp) transposed weights with gate order (i, f, o, g),
        # zero-padded so padded hidden units stay exactly 0 in the recurrence.
        gi, gf, gg, go = jnp.split(w.astype(jnp.float32), 4, axis=0)
        blocks = [jnp.pad(blk, ((0, Hp - H), (0, k_pad - blk.shape[1])))
                  for blk in (gi, gf, go, gg)]
        return jnp.transpose(jnp.concatenate(blocks, axis=0))

    wih_t = reorder_pad_gates(w_ih, Fp).astype(jnp.bfloat16)      # (Fp, 4Hp)
    whh_t = reorder_pad_gates(w_hh, Hp).astype(jnp.bfloat16)      # (Hp, 4Hp)

    b = (b_ih + b_hh).astype(jnp.float32)
    b_i, b_f, b_g, b_o = jnp.split(b, 4)
    bias = jnp.concatenate(
        [jnp.pad(v, (0, Hp - H)) for v in (b_i, b_f, b_o, b_g)]
    ).reshape(1, 4 * Hp)                                          # (1, 4Hp) f32

    fcw_t = jnp.pad(jnp.transpose(fc_w.astype(jnp.float32)),
                    ((0, Hp - H), (0, Cp - C))).astype(jnp.bfloat16)   # (Hp, Cp)
    # Padded class columns get a hugely negative f32 bias -> exp() == 0.
    fcb = jnp.pad(fc_b.astype(jnp.float32), (0, Cp - C),
                  constant_values=-1e30).reshape(1, Cp)

    # Time-major, bf16-streamed, batch/feature padded: (T, Bp, Fp) -> (Tpad*Bp, Fp).
    x_p = jnp.pad(x.astype(jnp.bfloat16), ((0, Bp - B), (0, 0), (0, Fp - F)))
    x_tbf = jnp.transpose(x_p, (1, 0, 2))
    Tpad = n_chunks * tc
    if Tpad != T:
        x_tbf = jnp.pad(x_tbf, ((0, Tpad - T), (0, 0), (0, 0)))
    x_2d = x_tbf.reshape(Tpad * Bp, Fp)
    # TODO(synk): accept time-major input / allow_input_fusion to avoid the
    #             extra HBM round trip of this transpose+pad when T*B*F is large.

    kernel = functools.partial(_lstm_kernel, seq_len=T, chunk_len=tc,
                               bf16_act=use_bf16_act, unroll=unroll)

    out = pl.pallas_call(
        kernel,
        out_shape=jax.ShapeDtypeStruct((Bp, Cp), jnp.float32),
        grid_spec=pltpu.PrefetchScalarGridSpec(
            num_scalar_prefetch=0,
            grid=(n_chunks,),
            in_specs=[
                pl.BlockSpec((tc * Bp, Fp), lambda c: (c, 0)),     # x chunk (bf16)
                pl.BlockSpec((Fp, 4 * Hp), lambda c: (0, 0)),      # W_ih^T (bf16)
                pl.BlockSpec((Hp, 4 * Hp), lambda c: (0, 0)),      # W_hh^T (bf16)
                pl.BlockSpec((1, 4 * Hp), lambda c: (0, 0)),       # bias (f32)
                pl.BlockSpec((Hp, Cp), lambda c: (0, 0)),          # fc W^T (bf16)
                pl.BlockSpec((1, Cp), lambda c: (0, 0)),           # fc bias (f32)
            ],
            out_specs=pl.BlockSpec((Bp, Cp), lambda c: (0, 0)),
            scratch_shapes=[
                pltpu.VMEM((tc * Bp, 4 * Hp), jnp.float32),        # gates_x chunk
                pltpu.VMEM((Bp, Hp), jnp.float32),                 # h state
                pltpu.VMEM((Bp, Hp), jnp.float32),                 # c state
            ],
        ),
        compiler_params=pltpu.CompilerParams(
            dimension_semantics=("arbitrary",),                    # sequential time
            vmem_limit_bytes=vmem_limit,
        ),
    )(x_2d, wih_t, whh_t, bias, fcw_t, fcb)

    return out[:B, :C]


def init_params(key, in_features, hidden_size, num_classes):
    """PyTorch-style deterministic init: U(-1/sqrt(H), 1/sqrt(H))."""
    k = 1.0 / jnp.sqrt(jnp.float32(hidden_size))
    keys = jax.random.split(key, 6)
    w_ih = jax.random.uniform(keys[0], (4 * hidden_size, in_features), jnp.float32, -k, k)
    w_hh = jax.random.uniform(keys[1], (4 * hidden_size, hidden_size), jnp.float32, -k, k)
    b_ih = jax.random.uniform(keys[2], (4 * hidden_size,), jnp.float32, -k, k)
    b_hh = jax.random.uniform(keys[3], (4 * hidden_size,), jnp.float32, -k, k)
    fc_w = jax.random.uniform(keys[4], (num_classes, hidden_size), jnp.float32, -k, k)
    fc_b = jax.random.uniform(keys[5], (num_classes,), jnp.float32, -k, k)
    return (w_ih, w_hh, b_ih, b_hh, fc_w, fc_b)


def _reference_forward(x, params, hidden_size, num_classes, *, quantize=False):
    """Pure-JAX reference matching nn.LSTM semantics.

    quantize=True rounds the MXU operands (x, h, weights) through bf16, matching
    what the kernel feeds the MXU, for a tighter numerical comparison.
    """
    w_ih, w_hh, b_ih, b_hh, fc_w, fc_b = params
    q = (lambda a: a.astype(jnp.bfloat16).astype(jnp.float32)) if quantize else (lambda a: a)
    if x.ndim == 2:
        x = x[:, None, :]
    B, T, F = x.shape
    H = hidden_size
    w_ih, w_hh, fc_w = q(w_ih), q(w_hh), q(fc_w)
    h = jnp.zeros((B, H), jnp.float32)
    c = jnp.zeros((B, H), jnp.float32)
    for t in range(T):
        g = q(x[:, t, :]) @ w_ih.T + b_ih + q(h) @ w_hh.T + b_hh
        i = jax.nn.sigmoid(g[:, 0 * H:1 * H])
        f = jax.nn.sigmoid(g[:, 1 * H:2 * H])
        gg = jnp.tanh(g[:, 2 * H:3 * H])
        o = jax.nn.sigmoid(g[:, 3 * H:4 * H])
        c = f * c + i * gg
        h = o * jnp.tanh(c)
    logits = q(h) @ fc_w.T + fc_b
    return jax.nn.softmax(logits, axis=1)


if __name__ == "__main__":
    B, T, F, H, C = 2, 8, 16, 32, 4
    key = jax.random.PRNGKey(0)
    kx, kp = jax.random.split(key)
    x = jax.random.normal(kx, (B, T, F), jnp.float32)
    params = init_params(kp, F, H, C)

    out = lstm_forward(x, params, hidden_size=H, num_classes=C)
    out = jax.block_until_ready(out)
    assert out.shape == (B, C)

    # Tight-ish check: reference with bf16-rounded MXU operands (the kernel
    # additionally runs bf16 gate activations on v6e/v7x, hence 1e-2).
    ref_q = _reference_forward(x, params, H, C, quantize=True)
    assert jnp.allclose(out, ref_q, atol=1e-2, rtol=1e-2), (out, ref_q)

    # Loose check: pure-f32 reference (bf16 MXU operands cause small drift).
    ref = _reference_forward(x, params, H, C, quantize=False)
    assert jnp.allclose(out, ref, atol=5e-2, rtol=5e-2), (out, ref)

    # Softmax rows sum to 1 (approx reciprocal -> slightly loose tolerance).
    assert jnp.allclose(jnp.sum(out, axis=1), 1.0, atol=2e-3)

    print("KERNEL_OK")
</pallas_src>

<mosaic_0001>
module attributes {stable_mosaic.version = 11 : i64} {
  func.func @_lstm_kernel(%arg0: i32, %arg1: memref<64x128xbf16, #tpu.memory_space<vmem>>, %arg2: memref<128x512xbf16, #tpu.memory_space<vmem>>, %arg3: memref<128x512xbf16, #tpu.memory_space<vmem>>, %arg4: memref<1x512xf32, #tpu.memory_space<vmem>>, %arg5: memref<128x128xbf16, #tpu.memory_space<vmem>>, %arg6: memref<1x128xf32, #tpu.memory_space<vmem>>, %arg7: memref<8x128xf32, #tpu.memory_space<vmem>>, %arg8: memref<64x512xf32, #tpu.memory_space<vmem>>, %arg9: memref<8x128xf32, #tpu.memory_space<vmem>>, %arg10: memref<8x128xf32, #tpu.memory_space<vmem>>) attributes {dimension_semantics = [#tpu.dimension_semantics<arbitrary>], iteration_bounds = array<i64: 1>, scalar_prefetch = 0 : i64, scratch_operands = 3 : i64, tpu.core_type = #tpu.core_type<tc>, window_params = [{transform_indices = @transform_0, window_bounds = array<i64: 64, 128>}, {pipeline_mode = #tpu.pipeline_mode<synchronous>, transform_indices = @transform_1, window_bounds = array<i64: 128, 512>}, {pipeline_mode = #tpu.pipeline_mode<synchronous>, transform_indices = @transform_2, window_bounds = array<i64: 128, 512>}, {pipeline_mode = #tpu.pipeline_mode<synchronous>, transform_indices = @transform_3, window_bounds = array<i64: 1, 512>}, {pipeline_mode = #tpu.pipeline_mode<synchronous>, transform_indices = @transform_4, window_bounds = array<i64: 128, 128>}, {pipeline_mode = #tpu.pipeline_mode<synchronous>, transform_indices = @transform_5, window_bounds = array<i64: 1, 128>}, {pipeline_mode = #tpu.pipeline_mode<synchronous>, transform_indices = @transform_6, window_bounds = array<i64: 8, 128>}]} {
    %c0_i32 = arith.constant 0 : i32
    %0 = arith.cmpi eq, %arg0, %c0_i32 : i32
    %1 = arith.extui %0 : i1 to i32
    %c0_i32_0 = arith.constant 0 : i32
    %2 = arith.cmpi ne, %1, %c0_i32_0 : i32
    scf.if %2 {
      %cst_69 = arith.constant 0.000000e+00 : f32
      %218 = vector.broadcast %cst_69 : f32 to vector<8x128xf32>
      %c0_70 = arith.constant 0 : index
      %c0_71 = arith.constant 0 : index
      %219 = vector.load %arg9[%c0_70, %c0_71] : memref<8x128xf32, #tpu.memory_space<vmem>>, vector<8x128xf32>
      tpu.vector_store %arg9[%c0_70, %c0_71], %218 {strides = array<i32>} : memref<8x128xf32, #tpu.memory_space<vmem>>, vector<8x128xf32>,
      %cst_72 = arith.constant 0.000000e+00 : f32
      %220 = vector.broadcast %cst_72 : f32 to vector<8x128xf32>
      %c0_73 = arith.constant 0 : index
      %c0_74 = arith.constant 0 : index
      %221 = vector.load %arg10[%c0_73, %c0_74] : memref<8x128xf32, #tpu.memory_space<vmem>>, vector<8x128xf32>
      tpu.vector_store %arg10[%c0_73, %c0_74], %220 {strides = array<i32>} : memref<8x128xf32, #tpu.memory_space<vmem>>, vector<8x128xf32>,
    } else {
    }
    %c0 = arith.constant 0 : index
    %c0_1 = arith.constant 0 : index
    %3 = vector.load %arg1[%c0, %c0_1] : memref<64x128xbf16, #tpu.memory_space<vmem>>, vector<64x128xbf16>
    %c0_2 = arith.constant 0 : index
    %c0_3 = arith.constant 0 : index
    %4 = vector.load %arg2[%c0_2, %c0_3] : memref<128x512xbf16, #tpu.memory_space<vmem>>, vector<128x512xbf16>
    %cst = arith.constant dense<0.000000e+00> : vector<64x512xf32>
    %5 = tpu.matmul %3, %4, %cst {dimension_numbers = #tpu.dot_dimension_numbers<[1], [0], [0], [1], [0, 0, 1, 1], [], []>} : vector<64x128xbf16>, vector<128x512xbf16>, vector<64x512xf32> -> vector<64x512xf32>
    %c0_4 = arith.constant 0 : index
    %c0_5 = arith.constant 0 : index
    %6 = vector.load %arg4[%c0_4, %c0_5] : memref<1x512xf32, #tpu.memory_space<vmem>>, vector<1x512xf32>
    %7 = vector.broadcast %6 : vector<1x512xf32> to vector<64x512xf32>
    %8 = arith.addf %5, %7 : vector<64x512xf32>
    %c0_6 = arith.constant 0 : index
    %c0_7 = arith.constant 0 : index
    %9 = vector.load %arg8[%c0_6, %c0_7] : memref<64x512xf32, #tpu.memory_space<vmem>>, vector<64x512xf32>
    tpu.vector_store %arg8[%c0_6, %c0_7], %8 {strides = array<i32>} : memref<64x512xf32, #tpu.memory_space<vmem>>, vector<64x512xf32>,
    %c0_8 = arith.constant 0 : index
    %c0_9 = arith.constant 0 : index
    %10 = vector.load %arg3[%c0_8, %c0_9] : memref<128x512xbf16, #tpu.memory_space<vmem>>, vector<128x512xbf16>
    %c0_10 = arith.constant 0 : index
    %c0_11 = arith.constant 0 : index
    %11 = vector.load %arg9[%c0_10, %c0_11] : memref<8x128xf32, #tpu.memory_space<vmem>>, vector<8x128xf32>
    %c0_12 = arith.constant 0 : index
    %c0_13 = arith.constant 0 : index
    %12 = vector.load %arg10[%c0_12, %c0_13] : memref<8x128xf32, #tpu.memory_space<vmem>>, vector<8x128xf32>
    %c0_i32_14 = arith.constant 0 : i32
    %c8_i32 = arith.constant 8 : i32
    %13 = arith.muli %c0_i32_14, %c8_i32 : i32
    %14 = tpu.assume_multiple %13, 8 : i32
    %15 = arith.index_cast %14 : i32 to index
    %c0_15 = arith.constant 0 : index
    %16 = vector.load %arg8[%15, %c0_15] : memref<64x512xf32, #tpu.memory_space<vmem>>, vector<8x512xf32>
    %17 = arith.truncf %11 : vector<8x128xf32> to vector<8x128xbf16>
    %cst_16 = arith.constant dense<0.000000e+00> : vector<8x512xf32>
    %18 = tpu.matmul %17, %10, %cst_16 {dimension_numbers = #tpu.dot_dimension_numbers<[1], [0], [0], [1], [0, 0, 1, 1], [], []>} : vector<8x128xbf16>, vector<128x512xbf16>, vector<8x512xf32> -> vector<8x512xf32>
    %19 = arith.addf %16, %18 : vector<8x512xf32>
    %20 = vector.extract_strided_slice %19 {offsets = [0, 0], sizes = [8, 384], strides = [1, 1]} : vector<8x512xf32> to vector<8x384xf32>
    %cst_17 = arith.constant 5.000000e-01 : f32
    %21 = vector.broadcast %cst_17 : f32 to vector<8x384xf32>
    %22 = arith.mulf %21, %20 : vector<8x384xf32>
    %23 = math.tanh %22 : vector<8x384xf32>
    %cst_18 = arith.constant 5.000000e-01 : f32
    %24 = vector.broadcast %cst_18 : f32 to vector<8x384xf32>
    %25 = arith.mulf %24, %23 : vector<8x384xf32>
    %cst_19 = arith.constant 5.000000e-01 : f32
    %26 = vector.broadcast %cst_19 : f32 to vector<8x384xf32>
    %27 = arith.addf %25, %26 : vector<8x384xf32>
    %28 = vector.extract_strided_slice %19 {offsets = [0, 384], sizes = [8, 128], strides = [1, 1]} : vector<8x512xf32> to vector<8x128xf32>
    %29 = math.tanh %28 : vector<8x128xf32>
    %30 = vector.extract_strided_slice %27 {offsets = [0, 0], sizes = [8, 128], strides = [1, 1]} : vector<8x384xf32> to vector<8x128xf32>
    %31 = vector.extract_strided_slice %27 {offsets = [0, 128], sizes = [8, 128], strides = [1, 1]} : vector<8x384xf32> to vector<8x128xf32>
    %32 = vector.extract_strided_slice %27 {offsets = [0, 256], sizes = [8, 128], strides = [1, 1]} : vector<8x384xf32> to vector<8x128xf32>
    %33 = arith.mulf %31, %12 : vector<8x128xf32>
    %34 = arith.mulf %30, %29 : vector<8x128xf32>
    %35 = arith.addf %33, %34 : vector<8x128xf32>
    %36 = math.tanh %35 : vector<8x128xf32>
    %37 = arith.mulf %32, %36 : vector<8x128xf32>
    %c1_i32 = arith.constant 1 : i32
    %c8_i32_20 = arith.constant 8 : i32
    %38 = arith.muli %c1_i32, %c8_i32_20 : i32
    %39 = tpu.assume_multiple %38, 8 : i32
    %40 = arith.index_cast %39 : i32 to index
    %c0_21 = arith.constant 0 : index
    %41 = vector.load %arg8[%40, %c0_21] : memref<64x512xf32, #tpu.memory_space<vmem>>, vector<8x512xf32>
    %42 = arith.truncf %37 : vector<8x128xf32> to vector<8x128xbf16>
    %cst_22 = arith.constant dense<0.000000e+00> : vector<8x512xf32>
    %43 = tpu.matmul %42, %10, %cst_22 {dimension_numbers = #tpu.dot_dimension_numbers<[1], [0], [0], [1], [0, 0, 1, 1], [], []>} : vector<8x128xbf16>, vector<128x512xbf16>, vector<8x512xf32> -> vector<8x512xf32>
    %44 = arith.addf %41, %43 : vector<8x512xf32>
    %45 = vector.extract_strided_slice %44 {offsets = [0, 0], sizes = [8, 384], strides = [1, 1]} : vector<8x512xf32> to vector<8x384xf32>
    %cst_23 = arith.constant 5.000000e-01 : f32
    %46 = vector.broadcast %cst_23 : f32 to vector<8x384xf32>
    %47 = arith.mulf %46, %45 : vector<8x384xf32>
    %48 = math.tanh %47 : vector<8x384xf32>
    %cst_24 = arith.constant 5.000000e-01 : f32
    %49 = vector.broadcast %cst_24 : f32 to vector<8x384xf32>
    %50 = arith.mulf %49, %48 : vector<8x384xf32>
    %cst_25 = arith.constant 5.000000e-01 : f32
    %51 = vector.broadcast %cst_25 : f32 to vector<8x384xf32>
    %52 = arith.addf %50, %51 : vector<8x384xf32>
    %53 = vector.extract_strided_slice %44 {offsets = [0, 384], sizes = [8, 128], strides = [1, 1]} : vector<8x512xf32> to vector<8x128xf32>
    %54 = math.tanh %53 : vector<8x128xf32>
    %55 = vector.extract_strided_slice %52 {offsets = [0, 0], sizes = [8, 128], strides = [1, 1]} : vector<8x384xf32> to vector<8x128xf32>
    %56 = vector.extract_strided_slice %52 {offsets = [0, 128], sizes = [8, 128], strides = [1, 1]} : vector<8x384xf32> to vector<8x128xf32>
    %57 = vector.extract_strided_slice %52 {offsets = [0, 256], sizes = [8, 128], strides = [1, 1]} : vector<8x384xf32> to vector<8x128xf32>
    %58 = arith.mulf %56, %35 : vector<8x128xf32>
    %59 = arith.mulf %55, %54 : vector<8x128xf32>
    %60 = arith.addf %58, %59 : vector<8x128xf32>
    %61 = math.tanh %60 : vector<8x128xf32>
    %62 = arith.mulf %57, %61 : vector<8x128xf32>
    %c2_i32 = arith.constant 2 : i32
    %c8_i32_26 = arith.constant 8 : i32
    %63 = arith.muli %c2_i32, %c8_i32_26 : i32
    %64 = tpu.assume_multiple %63, 8 : i32
    %65 = arith.index_cast %64 : i32 to index
    %c0_27 = arith.constant 0 : index
    %66 = vector.load %arg8[%65, %c0_27] : memref<64x512xf32, #tpu.memory_space<vmem>>, vector<8x512xf32>
    %67 = arith.truncf %62 : vector<8x128xf32> to vector<8x128xbf16>
    %cst_28 = arith.constant dense<0.000000e+00> : vector<8x512xf32>
    %68 = tpu.matmul %67, %10, %cst_28 {dimension_numbers = #tpu.dot_dimension_numbers<[1], [0], [0], [1], [0, 0, 1, 1], [], []>} : vector<8x128xbf16>, vector<128x512xbf16>, vector<8x512xf32> -> vector<8x512xf32>
    %69 = arith.addf %66, %68 : vector<8x512xf32>
    %70 = vector.extract_strided_slice %69 {offsets = [0, 0], sizes = [8, 384], strides = [1, 1]} : vector<8x512xf32> to vector<8x384xf32>
    %cst_29 = arith.constant 5.000000e-01 : f32
    %71 = vector.broadcast %cst_29 : f32 to vector<8x384xf32>
    %72 = arith.mulf %71, %70 : vector<8x384xf32>
    %73 = math.tanh %72 : vector<8x384xf32>
    %cst_30 = arith.constant 5.000000e-01 : f32
    %74 = vector.broadcast %cst_30 : f32 to vector<8x384xf32>
    %75 = arith.mulf %74, %73 : vector<8x384xf32>
    %cst_31 = arith.constant 5.000000e-01 : f32
    %76 = vector.broadcast %cst_31 : f32 to vector<8x384xf32>
    %77 = arith.addf %75, %76 : vector<8x384xf32>
    %78 = vector.extract_strided_slice %69 {offsets = [0, 384], sizes = [8, 128], strides = [1, 1]} : vector<8x512xf32> to vector<8x128xf32>
    %79 = math.tanh %78 : vector<8x128xf32>
    %80 = vector.extract_strided_slice %77 {offsets = [0, 0], sizes = [8, 128], strides = [1, 1]} : vector<8x384xf32> to vector<8x128xf32>
    %81 = vector.extract_strided_slice %77 {offsets = [0, 128], sizes = [8, 128], strides = [1, 1]} : vector<8x384xf32> to vector<8x128xf32>
    %82 = vector.extract_strided_slice %77 {offsets = [0, 256], sizes = [8, 128], strides = [1, 1]} : vector<8x384xf32> to vector<8x128xf32>
    %83 = arith.mulf %81, %60 : vector<8x128xf32>
    %84 = arith.mulf %80, %79 : vector<8x128xf32>
    %85 = arith.addf %83, %84 : vector<8x128xf32>
    %86 = math.tanh %85 : vector<8x128xf32>
    %87 = arith.mulf %82, %86 : vector<8x128xf32>
    %c3_i32 = arith.constant 3 : i32
    %c8_i32_32 = arith.constant 8 : i32
    %88 = arith.muli %c3_i32, %c8_i32_32 : i32
    %89 = tpu.assume_multiple %88, 8 : i32
    %90 = arith.index_cast %89 : i32 to index
    %c0_33 = arith.constant 0 : index
    %91 = vector.load %arg8[%90, %c0_33] : memref<64x512xf32, #tpu.memory_space<vmem>>, vector<8x512xf32>
    %92 = arith.truncf %87 : vector<8x128xf32> to vector<8x128xbf16>
    %cst_34 = arith.constant dense<0.000000e+00> : vector<8x512xf32>
    %93 = tpu.matmul %92, %10, %cst_34 {dimension_numbers = #tpu.dot_dimension_numbers<[1], [0], [0], [1], [0, 0, 1, 1], [], []>} : vector<8x128xbf16>, vector<128x512xbf16>, vector<8x512xf32> -> vector<8x512xf32>
    %94 = arith.addf %91, %93 : vector<8x512xf32>
    %95 = vector.extract_strided_slice %94 {offsets = [0, 0], sizes = [8, 384], strides = [1, 1]} : vector<8x512xf32> to vector<8x384xf32>
    %cst_35 = arith.constant 5.000000e-01 : f32
    %96 = vector.broadcast %cst_35 : f32 to vector<8x384xf32>
    %97 = arith.mulf %96, %95 : vector<8x384xf32>
    %98 = math.tanh %97 : vector<8x384xf32>
    %cst_36 = arith.constant 5.000000e-01 : f32
    %99 = vector.broadcast %cst_36 : f32 to vector<8x384xf32>
    %100 = arith.mulf %99, %98 : vector<8x384xf32>
    %cst_37 = arith.constant 5.000000e-01 : f32
    %101 = vector.broadcast %cst_37 : f32 to vector<8x384xf32>
    %102 = arith.addf %100, %101 : vector<8x384xf32>
    %103 = vector.extract_strided_slice %94 {offsets = [0, 384], sizes = [8, 128], strides = [1, 1]} : vector<8x512xf32> to vector<8x128xf32>
    %104 = math.tanh %103 : vector<8x128xf32>
    %105 = vector.extract_strided_slice %102 {offsets = [0, 0], sizes = [8, 128], strides = [1, 1]} : vector<8x384xf32> to vector<8x128xf32>
    %106 = vector.extract_strided_slice %102 {offsets = [0, 128], sizes = [8, 128], strides = [1, 1]} : vector<8x384xf32> to vector<8x128xf32>
    %107 = vector.extract_strided_slice %102 {offsets = [0, 256], sizes = [8, 128], strides = [1, 1]} : vector<8x384xf32> to vector<8x128xf32>
    %108 = arith.mulf %106, %85 : vector<8x128xf32>
    %109 = arith.mulf %105, %104 : vector<8x128xf32>
    %110 = arith.addf %108, %109 : vector<8x128xf32>
    %111 = math.tanh %110 : vector<8x128xf32>
    %112 = arith.mulf %107, %111 : vector<8x128xf32>
    %c4_i32 = arith.constant 4 : i32
    %c8_i32_38 = arith.constant 8 : i32
    %113 = arith.muli %c4_i32, %c8_i32_38 : i32
    %114 = tpu.assume_multiple %113, 8 : i32
    %115 = arith.index_cast %114 : i32 to index
    %c0_39 = arith.constant 0 : index
    %116 = vector.load %arg8[%115, %c0_39] : memref<64x512xf32, #tpu.memory_space<vmem>>, vector<8x512xf32>
    %117 = arith.truncf %112 : vector<8x128xf32> to vector<8x128xbf16>
    %cst_40 = arith.constant dense<0.000000e+00> : vector<8x512xf32>
    %118 = tpu.matmul %117, %10, %cst_40 {dimension_numbers = #tpu.dot_dimension_numbers<[1], [0], [0], [1], [0, 0, 1, 1], [], []>} : vector<8x128xbf16>, vector<128x512xbf16>, vector<8x512xf32> -> vector<8x512xf32>
    %119 = arith.addf %116, %118 : vector<8x512xf32>
    %120 = vector.extract_strided_slice %119 {offsets = [0, 0], sizes = [8, 384], strides = [1, 1]} : vector<8x512xf32> to vector<8x384xf32>
    %cst_41 = arith.constant 5.000000e-01 : f32
    %121 = vector.broadcast %cst_41 : f32 to vector<8x384xf32>
    %122 = arith.mulf %121, %120 : vector<8x384xf32>
    %123 = math.tanh %122 : vector<8x384xf32>
    %cst_42 = arith.constant 5.000000e-01 : f32
    %124 = vector.broadcast %cst_42 : f32 to vector<8x384xf32>
    %125 = arith.mulf %124, %123 : vector<8x384xf32>
    %cst_43 = arith.constant 5.000000e-01 : f32
    %126 = vector.broadcast %cst_43 : f32 to vector<8x384xf32>
    %127 = arith.addf %125, %126 : vector<8x384xf32>
    %128 = vector.extract_strided_slice %119 {offsets = [0, 384], sizes = [8, 128], strides = [1, 1]} : vector<8x512xf32> to vector<8x128xf32>
    %129 = math.tanh %128 : vector<8x128xf32>
    %130 = vector.extract_strided_slice %127 {offsets = [0, 0], sizes = [8, 128], strides = [1, 1]} : vector<8x384xf32> to vector<8x128xf32>
    %131 = vector.extract_strided_slice %127 {offsets = [0, 128], sizes = [8, 128], strides = [1, 1]} : vector<8x384xf32> to vector<8x128xf32>
    %132 = vector.extract_strided_slice %127 {offsets = [0, 256], sizes = [8, 128], strides = [1, 1]} : vector<8x384xf32> to vector<8x128xf32>
    %133 = arith.mulf %131, %110 : vector<8x128xf32>
    %134 = arith.mulf %130, %129 : vector<8x128xf32>
    %135 = arith.addf %133, %134 : vector<8x128xf32>
    %136 = math.tanh %135 : vector<8x128xf32>
    %137 = arith.mulf %132, %136 : vector<8x128xf32>
    %c5_i32 = arith.constant 5 : i32
    %c8_i32_44 = arith.constant 8 : i32
    %138 = arith.muli %c5_i32, %c8_i32_44 : i32
    %139 = tpu.assume_multiple %138, 8 : i32
    %140 = arith.index_cast %139 : i32 to index
    %c0_45 = arith.constant 0 : index
    %141 = vector.load %arg8[%140, %c0_45] : memref<64x512xf32, #tpu.memory_space<vmem>>, vector<8x512xf32>
    %142 = arith.truncf %137 : vector<8x128xf32> to vector<8x128xbf16>
    %cst_46 = arith.constant dense<0.000000e+00> : vector<8x512xf32>
    %143 = tpu.matmul %142, %10, %cst_46 {dimension_numbers = #tpu.dot_dimension_numbers<[1], [0], [0], [1], [0, 0, 1, 1], [], []>} : vector<8x128xbf16>, vector<128x512xbf16>, vector<8x512xf32> -> vector<8x512xf32>
    %144 = arith.addf %141, %143 : vector<8x512xf32>
    %145 = vector.extract_strided_slice %144 {offsets = [0, 0], sizes = [8, 384], strides = [1, 1]} : vector<8x512xf32> to vector<8x384xf32>
    %cst_47 = arith.constant 5.000000e-01 : f32
    %146 = vector.broadcast %cst_47 : f32 to vector<8x384xf32>
    %147 = arith.mulf %146, %145 : vector<8x384xf32>
    %148 = math.tanh %147 : vector<8x384xf32>
    %cst_48 = arith.constant 5.000000e-01 : f32
    %149 = vector.broadcast %cst_48 : f32 to vector<8x384xf32>
    %150 = arith.mulf %149, %148 : vector<8x384xf32>
    %cst_49 = arith.constant 5.000000e-01 : f32
    %151 = vector.broadcast %cst_49 : f32 to vector<8x384xf32>
    %152 = arith.addf %150, %151 : vector<8x384xf32>
    %153 = vector.extract_strided_slice %144 {offsets = [0, 384], sizes = [8, 128], strides = [1, 1]} : vector<8x512xf32> to vector<8x128xf32>
    %154 = math.tanh %153 : vector<8x128xf32>
    %155 = vector.extract_strided_slice %152 {offsets = [0, 0], sizes = [8, 128], strides = [1, 1]} : vector<8x384xf32> to vector<8x128xf32>
    %156 = vector.extract_strided_slice %152 {offsets = [0, 128], sizes = [8, 128], strides = [1, 1]} : vector<8x384xf32> to vector<8x128xf32>
    %157 = vector.extract_strided_slice %152 {offsets = [0, 256], sizes = [8, 128], strides = [1, 1]} : vector<8x384xf32> to vector<8x128xf32>
    %158 = arith.mulf %156, %135 : vector<8x128xf32>
    %159 = arith.mulf %155, %154 : vector<8x128xf32>
    %160 = arith.addf %158, %159 : vector<8x128xf32>
    %161 = math.tanh %160 : vector<8x128xf32>
    %162 = arith.mulf %157, %161 : vector<8x128xf32>
    %c6_i32 = arith.constant 6 : i32
    %c8_i32_50 = arith.constant 8 : i32
    %163 = arith.muli %c6_i32, %c8_i32_50 : i32
    %164 = tpu.assume_multiple %163, 8 : i32
    %165 = arith.index_cast %164 : i32 to index
    %c0_51 = arith.constant 0 : index
    %166 = vector.load %arg8[%165, %c0_51] : memref<64x512xf32, #tpu.memory_space<vmem>>, vector<8x512xf32>
    %167 = arith.truncf %162 : vector<8x128xf32> to vector<8x128xbf16>
    %cst_52 = arith.constant dense<0.000000e+00> : vector<8x512xf32>
    %168 = tpu.matmul %167, %10, %cst_52 {dimension_numbers = #tpu.dot_dimension_numbers<[1], [0], [0], [1], [0, 0, 1, 1], [], []>} : vector<8x128xbf16>, vector<128x512xbf16>, vector<8x512xf32> -> vector<8x512xf32>
    %169 = arith.addf %166, %168 : vector<8x512xf32>
    %170 = vector.extract_strided_slice %169 {offsets = [0, 0], sizes = [8, 384], strides = [1, 1]} : vector<8x512xf32> to vector<8x384xf32>
    %cst_53 = arith.constant 5.000000e-01 : f32
    %171 = vector.broadcast %cst_53 : f32 to vector<8x384xf32>
    %172 = arith.mulf %171, %170 : vector<8x384xf32>
    %173 = math.tanh %172 : vector<8x384xf32>
    %cst_54 = arith.constant 5.000000e-01 : f32
    %174 = vector.broadcast %cst_54 : f32 to vector<8x384xf32>
    %175 = arith.mulf %174, %173 : vector<8x384xf32>
    %cst_55 = arith.constant 5.000000e-01 : f32
    %176 = vector.broadcast %cst_55 : f32 to vector<8x384xf32>
    %177 = arith.addf %175, %176 : vector<8x384xf32>
    %178 = vector.extract_strided_slice %169 {offsets = [0, 384], sizes = [8, 128], strides = [1, 1]} : vector<8x512xf32> to vector<8x128xf32>
    %179 = math.tanh %178 : vector<8x128xf32>
    %180 = vector.extract_strided_slice %177 {offsets = [0, 0], sizes = [8, 128], strides = [1, 1]} : vector<8x384xf32> to vector<8x128xf32>
    %181 = vector.extract_strided_slice %177 {offsets = [0, 128], sizes = [8, 128], strides = [1, 1]} : vector<8x384xf32> to vector<8x128xf32>
    %182 = vector.extract_strided_slice %177 {offsets = [0, 256], sizes = [8, 128], strides = [1, 1]} : vector<8x384xf32> to vector<8x128xf32>
    %183 = arith.mulf %181, %160 : vector<8x128xf32>
    %184 = arith.mulf %180, %179 : vector<8x128xf32>
    %185 = arith.addf %183, %184 : vector<8x128xf32>
    %186 = math.tanh %185 : vector<8x128xf32>
    %187 = arith.mulf %182, %186 : vector<8x128xf32>
    %c7_i32 = arith.constant 7 : i32
    %c8_i32_56 = arith.constant 8 : i32
    %188 = arith.muli %c7_i32, %c8_i32_56 : i32
    %189 = tpu.assume_multiple %188, 8 : i32
    %190 = arith.index_cast %189 : i32 to index
    %c0_57 = arith.constant 0 : index
    %191 = vector.load %arg8[%190, %c0_57] : memref<64x512xf32, #tpu.memory_space<vmem>>, vector<8x512xf32>
    %192 = arith.truncf %187 : vector<8x128xf32> to vector<8x128xbf16>
    %cst_58 = arith.constant dense<0.000000e+00> : vector<8x512xf32>
    %193 = tpu.matmul %192, %10, %cst_58 {dimension_numbers = #tpu.dot_dimension_numbers<[1], [0], [0], [1], [0, 0, 1, 1], [], []>} : vector<8x128xbf16>, vector<128x512xbf16>, vector<8x512xf32> -> vector<8x512xf32>
    %194 = arith.addf %191, %193 : vector<8x512xf32>
    %195 = vector.extract_strided_slice %194 {offsets = [0, 0], sizes = [8, 384], strides = [1, 1]} : vector<8x512xf32> to vector<8x384xf32>
    %cst_59 = arith.constant 5.000000e-01 : f32
    %196 = vector.broadcast %cst_59 : f32 to vector<8x384xf32>
    %197 = arith.mulf %196, %195 : vector<8x384xf32>
    %198 = math.tanh %197 : vector<8x384xf32>
    %cst_60 = arith.constant 5.000000e-01 : f32
    %199 = vector.broadcast %cst_60 : f32 to vector<8x384xf32>
    %200 = arith.mulf %199, %198 : vector<8x384xf32>
    %cst_61 = arith.constant 5.000000e-01 : f32
    %201 = vector.broadcast %cst_61 : f32 to vector<8x384xf32>
    %202 = arith.addf %200, %201 : vector<8x384xf32>
    %203 = vector.extract_strided_slice %194 {offsets = [0, 384], sizes = [8, 128], strides = [1, 1]} : vector<8x512xf32> to vector<8x128xf32>
    %204 = math.tanh %203 : vector<8x128xf32>
    %205 = vector.extract_strided_slice %202 {offsets = [0, 0], sizes = [8, 128], strides = [1, 1]} : vector<8x384xf32> to vector<8x128xf32>
    %206 = vector.extract_strided_slice %202 {offsets = [0, 128], sizes = [8, 128], strides = [1, 1]} : vector<8x384xf32> to vector<8x128xf32>
    %207 = vector.extract_strided_slice %202 {offsets = [0, 256], sizes = [8, 128], strides = [1, 1]} : vector<8x384xf32> to vector<8x128xf32>
    %208 = arith.mulf %206, %185 : vector<8x128xf32>
    %209 = arith.mulf %205, %204 : vector<8x128xf32>
    %210 = arith.addf %208, %209 : vector<8x128xf32>
    %211 = math.tanh %210 : vector<8x128xf32>
    %212 = arith.mulf %207, %211 : vector<8x128xf32>
    %c8_i32_62 = arith.constant 8 : i32
    %c0_63 = arith.constant 0 : index
    %c0_64 = arith.constant 0 : index
    %213 = vector.load %arg9[%c0_63, %c0_64] : memref<8x128xf32, #tpu.memory_space<vmem>>, vector<8x128xf32>
    tpu.vector_store %arg9[%c0_63, %c0_64], %212 {strides = array<i32>} : memref<8x128xf32, #tpu.memory_space<vmem>>, vector<8x128xf32>,
    %c0_65 = arith.constant 0 : index
    %c0_66 = arith.constant 0 : index
    %214 = vector.load %arg10[%c0_65, %c0_66] : memref<8x128xf32, #tpu.memory_space<vmem>>, vector<8x128xf32>
    tpu.vector_store %arg10[%c0_65, %c0_66], %210 {strides = array<i32>} : memref<8x128xf32, #tpu.memory_space<vmem>>, vector<8x128xf32>,
    %c0_i32_67 = arith.constant 0 : i32
    %215 = arith.cmpi eq, %arg0, %c0_i32_67 : i32
    %216 = arith.extui %215 : i1 to i32
    %c0_i32_68 = arith.constant 0 : i32
    %217 = arith.cmpi ne, %216, %c0_i32_68 : i32
    scf.if %217 {
      %218 = arith.truncf %212 : vector<8x128xf32> to vector<8x128xbf16>
      %c0_69 = arith.constant 0 : index
      %c0_70 = arith.constant 0 : index
      %219 = vector.load %arg5[%c0_69, %c0_70] : memref<128x128xbf16, #tpu.memory_space<vmem>>, vector<128x128xbf16>
      %cst_71 = arith.constant dense<0.000000e+00> : vector<8x128xf32>
      %220 = tpu.matmul %218, %219, %cst_71 {dimension_numbers = #tpu.dot_dimension_numbers<[1], [0], [0], [1], [0, 0, 1, 1], [], []>} : vector<8x128xbf16>, vector<128x128xbf16>, vector<8x128xf32> -> vector<8x128xf32>
      %c0_72 = arith.constant 0 : index
      %c0_73 = arith.constant 0 : index
      %221 = vector.load %arg6[%c0_72, %c0_73] : memref<1x128xf32, #tpu.memory_space<vmem>>, vector<1x128xf32>
      %222 = vector.broadcast %221 : vector<1x128xf32> to vector<8x128xf32>
      %223 = arith.addf %220, %222 : vector<8x128xf32>
      %cst_74 = arith.constant dense<0xFF800000> : vector<8xf32>
      %224 = vector.multi_reduction <maximumf>, %223, %cst_74 [1] : vector<8x128xf32> to vector<8xf32>
      %225 = vector.shape_cast %224 : vector<8xf32> to vector<8x1xf32>
      %226 = vector.broadcast %225 : vector<8x1xf32> to vector<8x128xf32>
      %227 = arith.subf %223, %226 : vector<8x128xf32>
      %228 = math.exp %227 : vector<8x128xf32>
      %cst_75 = arith.constant dense<0.000000e+00> : vector<8xf32>
      %229 = vector.multi_reduction <add>, %228, %cst_75 [1] : vector<8x128xf32> to vector<8xf32>
      %230 = vector.shape_cast %229 : vector<8xf32> to vector<8x1xf32>
      %231 = tpu.reciprocal %230 {approx = true} : vector<8x1xf32> -> vector<8x1xf32>
      %232 = vector.broadcast %231 : vector<8x1xf32> to vector<8x128xf32>
      %233 = arith.mulf %228, %232 : vector<8x128xf32>
      %c0_76 = arith.constant 0 : index
      %c0_77 = arith.constant 0 : index
      %234 = vector.load %arg7[%c0_76, %c0_77] : memref<8x128xf32, #tpu.memory_space<vmem>>, vector<8x128xf32>
      tpu.vector_store %arg7[%c0_76, %c0_77], %233 {strides = array<i32>} : memref<8x128xf32, #tpu.memory_space<vmem>>, vector<8x128xf32>,
    } else {
    }
    return
  }
  func.func @transform_0(%arg0: i32) -> (i32, i32) {
    %c0_i32 = arith.constant 0 : i32
    %c0_i32_0 = arith.constant 0 : i32
    return %arg0, %c0_i32 : i32, i32
  }
  func.func @transform_1(%arg0: i32) -> (i32, i32) {
    %c0_i32 = arith.constant 0 : i32
    %c0_i32_0 = arith.constant 0 : i32
    %c0_i32_1 = arith.constant 0 : i32
    return %c0_i32, %c0_i32_0 : i32, i32
  }
  func.func @transform_2(%arg0: i32) -> (i32, i32) {
    %c0_i32 = arith.constant 0 : i32
    %c0_i32_0 = arith.constant 0 : i32
    %c0_i32_1 = arith.constant 0 : i32
    return %c0_i32, %c0_i32_0 : i32, i32
  }
  func.func @transform_3(%arg0: i32) -> (i32, i32) {
    %c0_i32 = arith.constant 0 : i32
    %c0_i32_0 = arith.constant 0 : i32
    %c0_i32_1 = arith.constant 0 : i32
    return %c0_i32, %c0_i32_0 : i32, i32
  }
  func.func @transform_4(%arg0: i32) -> (i32, i32) {
    %c0_i32 = arith.constant 0 : i32
    %c0_i32_0 = arith.constant 0 : i32
    %c0_i32_1 = arith.constant 0 : i32
    return %c0_i32, %c0_i32_0 : i32, i32
  }
  func.func @transform_5(%arg0: i32) -> (i32, i32) {
    %c0_i32 = arith.constant 0 : i32
    %c0_i32_0 = arith.constant 0 : i32
    %c0_i32_1 = arith.constant 0 : i32
    return %c0_i32, %c0_i32_0 : i32, i32
  }
  func.func @transform_6(%arg0: i32) -> (i32, i32) {
    %c0_i32 = arith.constant 0 : i32
    %c0_i32_0 = arith.constant 0 : i32
    %c0_i32_1 = arith.constant 0 : i32
    return %c0_i32, %c0_i32_0 : i32, i32
  }
}

</mosaic_0001>

<llo_original>
// kernel: lstm_forward.1
$region0: #{lstm_forward.1}
  #allocation0 [shape = 'u32[]', space=smem, size = 0x4, offset = 0x4, fixed_abs, tag = 'smem constant byte address 0x4 - core index']
  #allocation1 [shape = 'u32[144,128]{1,0:T(1,128)}', space=vmem, size = 0x12000, scoped, tag = 'internal scratch']
  #allocation2 [shape = 'f32[64,512]{1,0:T(8,128)}', space=vmem, size = 0x20000, scoped, tag = 'scratch operand']
  #allocation3 [shape = 'f32[8,128]{1,0:T(8,128)}', space=vmem, size = 0x1000, scoped, tag = 'scratch operand']
  #allocation4 [shape = 'f32[8,128]{1,0:T(8,128)}', space=vmem, size = 0x1000, scoped, tag = 'scratch operand']
  %s0 = inlined_call_operand.hbm [shape: bf16[64,128], index: 0, kind: input, shape index: {}]
  %s1 = inlined_call_operand.hbm [shape: bf16[128,512], index: 1, kind: input, shape index: {}]
  %s2 = inlined_call_operand.hbm [shape: bf16[128,512], index: 2, kind: input, shape index: {}]
  %s3 = inlined_call_operand.hbm [shape: f32[1,512], index: 3, kind: input, shape index: {}]
  %s4 = inlined_call_operand.hbm [shape: bf16[128,128], index: 4, kind: input, shape index: {}]
  %s5 = inlined_call_operand.hbm [shape: f32[1,128], index: 5, kind: input, shape index: {}]
  %s6 = inlined_call_operand.hbm [shape: f32[8,128], index: 6, kind: output, shape index: {}]
  %s7 = sld [smem:[#allocation0]]
  $region66: #{lstm_forward.1} parent=0
    _
  %s9 = ssub.s32 1, %s7
  %s10 = scalar_select 0, %s9, %s7
  $region1: #{lstm_forward.1} parent=0
    #allocation5 [shape = 'u8[16384]{0}', space=vmem, size = 0x4000, scoped, tag = 'input window, operand 0, single buffered']
    #allocation6 [shape = 's32[1]{0}', space=sflag, size = 0x4, scoped, tag = 'scoped memory for lstm_forward.1']
    #allocation7 [shape = 's32[1]{0}', space=sflag, size = 0x4, scoped, tag = 'scoped memory for lstm_forward.1']
    #allocation8 [shape = 'u8[131072]{0}', space=vmem, size = 0x20000, scoped, tag = 'input window, operand 1, single buffered']
    #allocation9 [shape = 's32[1]{0}', space=sflag, size = 0x4, scoped, tag = 'scoped memory for lstm_forward.1']
    #allocation10 [shape = 'u8[131072]{0}', space=vmem, size = 0x20000, scoped, tag = 'input window, operand 2, single buffered']
    #allocation11 [shape = 'u8[2048]{0}', space=vmem, size = 0x800, scoped, tag = 'input window, operand 3, single buffered']
    #allocation12 [shape = 's32[1]{0}', space=sflag, size = 0x4, scoped, tag = 'scoped memory for lstm_forward.1']
    #allocation13 [shape = 'u8[32768]{0}', space=vmem, size = 0x8000, scoped, tag = 'input window, operand 4, single buffered']
    #allocation14 [shape = 'u8[512]{0}', space=vmem, size = 0x400, scoped, tag = 'input window, operand 5, single buffered']
    #allocation15 [shape = 's32[1]{0}', space=sflag, size = 0x4, scoped, tag = 'scoped memory for lstm_forward.1']
    #allocation16 [shape = 'u8[4096]{0}', space=vmem, size = 0x1000, scoped, tag = 'output window, operand 0, single buffered']
    %11 = vsyncpa [#allocation6], 0
    %12 = vsyncpa [#allocation9], 0
    %13 = vsyncpa [#allocation12], 0
    %14 = vsyncpa [#allocation15], 0
    %15 = vsyncpa [#allocation7], 0
    // Predicated region
    $region2: #{lstm_forward.1} parent=1 // pred_check
      _
    $region3: #{lstm_forward.1} parent=1 // pred_check_branch
      %17 = sbr.rel (0) target = $region5
    $region4: #{lstm_forward.1} parent=1 // pred_region
      %s19 = ssub.s32 512, 512
      %20 = vsyncadd [#allocation6], %s19
      %s21 = sshll.u32 [#allocation5], 4
      %s22 = int_to_ptr.vmem [resolvable:$true] %s21
      %27 = dma.hbm_to_vmem [thread:$0]  %s0, 512, %s22, [#allocation6], 64, 64, 4
    $region5: #{lstm_forward.1} parent=1 // pred_fallthru
      _
    // Predicated region
    $region6: #{lstm_forward.1} parent=1 // pred_check
      _
    $region7: #{lstm_forward.1} parent=1 // pred_check_branch
      %29 = sbr.rel (0) target = $region9
    $region8: #{lstm_forward.1} parent=1 // pred_region
      %s31 = ssub.s32 4096, 4096
      %32 = vsyncadd [#allocation9], %s31
      %s33 = sshll.u32 [#allocation8], 4
      %s34 = int_to_ptr.vmem [resolvable:$true] %s33
      %39 = dma.hbm_to_vmem [thread:$0]  %s1, 4096, %s34, [#allocation9], 256, 256, 16
    $region9: #{lstm_forward.1} parent=1 // pred_fallthru
      _
    // Predicated region
    $region10: #{lstm_forward.1} parent=1 // pred_check
      _
    $region11: #{lstm_forward.1} parent=1 // pred_check_branch
      %41 = sbr.rel (0) target = $region13
    $region12: #{lstm_forward.1} parent=1 // pred_region
      %s43 = ssub.s32 4096, 4096
      %44 = vsyncadd [#allocation9], %s43
      %s45 = sshll.u32 [#allocation10], 4
      %s46 = int_to_ptr.vmem [resolvable:$true] %s45
      %51 = dma.hbm_to_vmem [thread:$0]  %s2, 4096, %s46, [#allocation9], 256, 256, 16
    $region13: #{lstm_forward.1} parent=1 // pred_fallthru
      _
    // Predicated region
    $region14: #{lstm_forward.1} parent=1 // pred_check
      _
    $region15: #{lstm_forward.1} parent=1 // pred_check_branch
      %53 = sbr.rel (0) target = $region17
    $region16: #{lstm_forward.1} parent=1 // pred_region
      %s55 = ssub.s32 64, 64
      %56 = vsyncadd [#allocation12], %s55
      %s58 = sshll.u32 [#allocation11], 4
      %s59 = int_to_ptr.vmem [resolvable:$true] %s58
      %61 = dma.hbm_to_vmem [thread:$0]  %s3, 64, %s59, [#allocation12]
    $region17: #{lstm_forward.1} parent=1 // pred_fallthru
      _
    // Predicated region
    $region18: #{lstm_forward.1} parent=1 // pred_check
      _
    $region19: #{lstm_forward.1} parent=1 // pred_check_branch
      %63 = sbr.rel (0) target = $region21
    $region20: #{lstm_forward.1} parent=1 // pred_region
      %s65 = ssub.s32 1024, 1024
      %66 = vsyncadd [#allocation12], %s65
      %s67 = sshll.u32 [#allocation13], 4
      %s68 = int_to_ptr.vmem [resolvable:$true] %s67
      %73 = dma.hbm_to_vmem [thread:$0]  %s4, 1024, %s68, [#allocation12], 64, 64, 4
    $region21: #{lstm_forward.1} parent=1 // pred_fallthru
      _
    // Predicated region
    $region22: #{lstm_forward.1} parent=1 // pred_check
      _
    $region23: #{lstm_forward.1} parent=1 // pred_check_branch
      %75 = sbr.rel (0) target = $region25
    $region24: #{lstm_forward.1} parent=1 // pred_region
      %s77 = ssub.s32 16, 16
      %78 = vsyncadd [#allocation15], %s77
      %s80 = sshll.u32 [#allocation14], 4
      %s81 = int_to_ptr.vmem [resolvable:$true] %s80
      %83 = dma.hbm_to_vmem [thread:$0]  %s5, 16, %s81, [#allocation15]
    $region25: #{lstm_forward.1} parent=1 // pred_fallthru
      _
    // Predicated region
    $region26: #{lstm_forward.1} parent=1 // pred_check
      _
    $region27: #{lstm_forward.1} parent=1 // pred_check_branch
      %85 = sbr.rel (0) target = $region29
    $region28: #{lstm_forward.1} parent=1 // pred_region
      %86 = dma.done [#allocation6], 512
    $region29: #{lstm_forward.1} parent=1 // pred_fallthru
      _
    // Predicated region
    $region30: #{lstm_forward.1} parent=1 // pred_check
      _
    $region31: #{lstm_forward.1} parent=1 // pred_check_branch
      %88 = sbr.rel (0) target = $region33
    $region32: #{lstm_forward.1} parent=1 // pred_region
      %89 = dma.done [#allocation9], 4096
    $region33: #{lstm_forward.1} parent=1 // pred_fallthru
      _
    // Predicated region
    $region34: #{lstm_forward.1} parent=1 // pred_check
      _
    $region35: #{lstm_forward.1} parent=1 // pred_check_branch
      %91 = sbr.rel (0) target = $region37
    $region36: #{lstm_forward.1} parent=1 // pred_region
      %92 = dma.done [#allocation9], 4096
    $region37: #{lstm_forward.1} parent=1 // pred_fallthru
      _
    // Predicated region
    $region38: #{lstm_forward.1} parent=1 // pred_check
      _
    $region39: #{lstm_forward.1} parent=1 // pred_check_branch
      %94 = sbr.rel (0) target = $region41
    $region40: #{lstm_forward.1} parent=1 // pred_region
      %95 = dma.done [#allocation12], 64
    $region41: #{lstm_forward.1} parent=1 // pred_fallthru
      _
    // Predicated region
    $region42: #{lstm_forward.1} parent=1 // pred_check
      _
    $region43: #{lstm_forward.1} parent=1 // pred_check_branch
      %97 = sbr.rel (0) target = $region45
    $region44: #{lstm_forward.1} parent=1 // pred_region
      %98 = dma.done [#allocation12], 1024
    $region45: #{lstm_forward.1} parent=1 // pred_fallthru
      _
    // Predicated region
    $region46: #{lstm_forward.1} parent=1 // pred_check
      _
    $region47: #{lstm_forward.1} parent=1 // pred_check_branch
      %100 = sbr.rel (0) target = $region49
    $region48: #{lstm_forward.1} parent=1 // pred_region
      %101 = dma.done [#allocation15], 16
    $region49: #{lstm_forward.1} parent=1 // pred_fallthru
      _
    %p103 = scmp.eq.s32.totalorder 0, 0
    // Predicated region
    $region50: #{lstm_forward.1} parent=1 // pred_check
      %p104 = pneg %p103
    $region51: #{lstm_forward.1} parent=1 // pred_check_branch
      %106 = sbr.rel (%p104) target = $region53
    $region52: #{lstm_forward.1} parent=1 // pred_region
      %107 = vst [vmem:[#allocation3] sm:$0xff] 0.0
      %108 = vst [vmem:[#allocation4] sm:$0xff] 0.0
    $region53: #{lstm_forward.1} parent=1 // pred_fallthru
      _
    %v109 = vld [vmem:[#allocation5] sm:$0xf]
    %v110 = vld [vmem:[#allocation5 + $0x4] sm:$0xf]
    %v111 = vld [vmem:[#allocation5 + $0x8] sm:$0xf]
    %v112 = vld [vmem:[#allocation5 + $0xc] sm:$0xf]
    %v113 = vld [vmem:[#allocation5 + $0x10] sm:$0xf]
    %v114 = vld [vmem:[#allocation5 + $0x14] sm:$0xf]
    %v115 = vld [vmem:[#allocation5 + $0x18] sm:$0xf]
    %v116 = vld [vmem:[#allocation5 + $0x1c] sm:$0xf]
    %v117 = vld [vmem:[#allocation8] sm:$0xff]
    %v118 = vld [vmem:[#allocation8 + $0x8] sm:$0xff]
    %v119 = vld [vmem:[#allocation8 + $0x10] sm:$0xff]
    %v120 = vld [vmem:[#allocation8 + $0x18] sm:$0xff]
    %v121 = vld [vmem:[#allocation8 + $0x20] sm:$0xff]
    %v122 = vld [vmem:[#allocation8 + $0x28] sm:$0xff]
    %v123 = vld [vmem:[#allocation8 + $0x30] sm:$0xff]
    %v124 = vld [vmem:[#allocation8 + $0x38] sm:$0xff]
    %v125 = vld [vmem:[#allocation8 + $0x40] sm:$0xff]
    %v126 = vld [vmem:[#allocation8 + $0x48] sm:$0xff]
    %v127 = vld [vmem:[#allocation8 + $0x50] sm:$0xff]
    %v128 = vld [vmem:[#allocation8 + $0x58] sm:$0xff]
    %v129 = vld [vmem:[#allocation8 + $0x60] sm:$0xff]
    %v130 = vld [vmem:[#allocation8 + $0x68] sm:$0xff]
    %v131 = vld [vmem:[#allocation8 + $0x70] sm:$0xff]
    %v132 = vld [vmem:[#allocation8 + $0x78] sm:$0xff]
    %v133 = vld [vmem:[#allocation8 + $0x80] sm:$0xff]
    %v134 = vld [vmem:[#allocation8 + $0x88] sm:$0xff]
    %v135 = vld [vmem:[#allocation8 + $0x90] sm:$0xff]
    %v136 = vld [vmem:[#allocation8 + $0x98] sm:$0xff]
    %v137 = vld [vmem:[#allocation8 + $0xa0] sm:$0xff]
    %v138 = vld [vmem:[#allocation8 + $0xa8] sm:$0xff]
    %v139 = vld [vmem:[#allocation8 + $0xb0] sm:$0xff]
    %v140 = vld [vmem:[#allocation8 + $0xb8] sm:$0xff]
    %v141 = vld [vmem:[#allocation8 + $0xc0] sm:$0xff]
    %v142 = vld [vmem:[#allocation8 + $0xc8] sm:$0xff]
    %v143 = vld [vmem:[#allocation8 + $0xd0] sm:$0xff]
    %v144 = vld [vmem:[#allocation8 + $0xd8] sm:$0xff]
    %v145 = vld [vmem:[#allocation8 + $0xe0] sm:$0xff]
    %v146 = vld [vmem:[#allocation8 + $0xe8] sm:$0xff]
    %v147 = vld [vmem:[#allocation8 + $0xf0] sm:$0xff]
    %v148 = vld [vmem:[#allocation8 + $0xf8] sm:$0xff]
    %v149 = vld [vmem:[#allocation11] sm:$0xf]
    %v151 = vlaneseq
    %v152 = vshrl.u32 %v151, 7
    %v153 = vsub.s32 0, %v152
    %v154 = vrot.slane %v149, %v153
    %v155 = vlaneseq
    %v156 = vshrl.u32 %v155, 7
    %v157 = vsub.s32 1, %v156
    %v158 = vrot.slane %v149, %v157
    %v159 = vlaneseq
    %v160 = vshrl.u32 %v159, 7
    %v161 = vsub.s32 2, %v160
    %v162 = vrot.slane %v149, %v161
    %v163 = vlaneseq
    %v164 = vshrl.u32 %v163, 7
    %v165 = vsub.s32 3, %v164
    %v166 = vrot.slane %v149, %v165
    %v179 = vunpack.c.l.b16 %v109
    %v180 = vunpack.c.l.b16 %v110
    %v181 = vunpack.c.l.b16 %v111
    %v182 = vunpack.c.l.b16 %v112
    %v183 = vunpack.c.l.b16 %v113
    %v184 = vunpack.c.l.b16 %v114
    %v185 = vunpack.c.l.b16 %v115
    %v186 = vunpack.c.l.b16 %v116
    %v187 = vpack.c.b16 %v180, %v179
    %v188 = vpack.c.b16 %v182, %v181
    %v189 = vpack.c.b16 %v184, %v183
    %v190 = vpack.c.b16 %v186, %v185
    %v227 = vunpack.c.l.b16 %v117
    %v228 = vunpack.c.h.b16 %v117
    %v229 = vunpack.c.l.b16 %v118
    %v230 = vunpack.c.h.b16 %v118
    %v231 = vunpack.c.l.b16 %v119
    %v232 = vunpack.c.h.b16 %v119
    %v233 = vunpack.c.l.b16 %v120
    %v234 = vunpack.c.h.b16 %v120
    %v235 = vunpack.c.l.b16 %v121
    %v236 = vunpack.c.h.b16 %v121
    %v237 = vunpack.c.l.b16 %v122
    %v238 = vunpack.c.h.b16 %v122
    %v239 = vunpack.c.l.b16 %v123
    %v240 = vunpack.c.h.b16 %v123
    %v241 = vunpack.c.l.b16 %v124
    %v242 = vunpack.c.h.b16 %v124
    %v243 = vunpack.c.l.b16 %v125
    %v244 = vunpack.c.h.b16 %v125
    %v245 = vunpack.c.l.b16 %v126
    %v246 = vunpack.c.h.b16 %v126
    %v247 = vunpack.c.l.b16 %v127
    %v248 = vunpack.c.h.b16 %v127
    %v249 = vunpack.c.l.b16 %v128
    %v250 = vunpack.c.h.b16 %v128
    %v251 = vunpack.c.l.b16 %v129
    %v252 = vunpack.c.h.b16 %v129
    %v253 = vunpack.c.l.b16 %v130
    %v254 = vunpack.c.h.b16 %v130
    %v255 = vunpack.c.l.b16 %v131
    %v256 = vunpack.c.h.b16 %v131
    %v257 = vunpack.c.l.b16 %v132
    %v258 = vunpack.c.h.b16 %v132
    %v259 = vunpack.c.l.b16 %v133
    %v260 = vunpack.c.h.b16 %v133
    %v261 = vunpack.c.l.b16 %v134
    %v262 = vunpack.c.h.b16 %v134
    %v263 = vunpack.c.l.b16 %v135
    %v264 = vunpack.c.h.b16 %v135
    %v265 = vunpack.c.l.b16 %v136
    %v266 = vunpack.c.h.b16 %v136
    %v267 = vunpack.c.l.b16 %v137
    %v268 = vunpack.c.h.b16 %v137
    %v269 = vunpack.c.l.b16 %v138
    %v270 = vunpack.c.h.b16 %v138
    %v271 = vunpack.c.l.b16 %v139
    %v272 = vunpack.c.h.b16 %v139
    %v273 = vunpack.c.l.b16 %v140
    %v274 = vunpack.c.h.b16 %v140
    %v275 = vunpack.c.l.b16 %v141
    %v276 = vunpack.c.h.b16 %v141
    %v277 = vunpack.c.l.b16 %v142
    %v278 = vunpack.c.h.b16 %v142
    %v279 = vunpack.c.l.b16 %v143
    %v280 = vunpack.c.h.b16 %v143
    %v281 = vunpack.c.l.b16 %v144
    %v282 = vunpack.c.h.b16 %v144
    %v283 = vunpack.c.l.b16 %v145
    %v284 = vunpack.c.h.b16 %v145
    %v285 = vunpack.c.l.b16 %v146
    %v286 = vunpack.c.h.b16 %v146
    %v287 = vunpack.c.l.b16 %v147
    %v288 = vunpack.c.h.b16 %v147
    %v289 = vunpack.c.l.b16 %v148
    %v290 = vunpack.c.h.b16 %v148
    %v291 = vpack.c.b16 %v231, %v227
    %v292 = vpack.c.b16 %v232, %v228
    %v293 = vpack.c.b16 %v233, %v229
    %v294 = vpack.c.b16 %v234, %v230
    %v295 = vpack.c.b16 %v239, %v235
    %v296 = vpack.c.b16 %v240, %v236
    %v297 = vpack.c.b16 %v241, %v237
    %v298 = vpack.c.b16 %v242, %v238
    %v299 = vpack.c.b16 %v247, %v243
    %v300 = vpack.c.b16 %v248, %v244
    %v301 = vpack.c.b16 %v249, %v245
    %v302 = vpack.c.b16 %v250, %v246
    %v303 = vpack.c.b16 %v255, %v251
    %v304 = vpack.c.b16 %v256, %v252
    %v305 = vpack.c.b16 %v257, %v253
    %v306 = vpack.c.b16 %v258, %v254
    %v307 = vpack.c.b16 %v263, %v259
    %v308 = vpack.c.b16 %v264, %v260
    %v309 = vpack.c.b16 %v265, %v261
    %v310 = vpack.c.b16 %v266, %v262
    %v311 = vpack.c.b16 %v271, %v267
    %v312 = vpack.c.b16 %v272, %v268
    %v313 = vpack.c.b16 %v273, %v269
    %v314 = vpack.c.b16 %v274, %v270
    %v315 = vpack.c.b16 %v279, %v275
    %v316 = vpack.c.b16 %v280, %v276
    %v317 = vpack.c.b16 %v281, %v277
    %v318 = vpack.c.b16 %v282, %v278
    %v319 = vpack.c.b16 %v287, %v283
    %v320 = vpack.c.b16 %v288, %v284
    %v321 = vpack.c.b16 %v289, %v285
    %v322 = vpack.c.b16 %v290, %v286
    %355 = vmatprep.subr.bf16.mxu0 %v292
    %356 = vmatpush1.bf16.msra.mxu0 %v291
    %357 = vmatprep.subr.bf16.mxu0 %v296
    %358 = vmatpush1.bf16.msra.mxu0 %v295
    %359 = vmatprep.subr.bf16.mxu0 %v300
    %360 = vmatpush1.bf16.msra.mxu0 %v299
    %361 = vmatprep.subr.bf16.mxu0 %v304
    %362 = vmatpush1.bf16.msra.mxu0 %v303
    %363 = vmatprep.subr.bf16.mxu0 %v308
    %364 = vmatpush1.bf16.msra.mxu0 %v307
    %365 = vmatprep.subr.bf16.mxu0 %v312
    %366 = vmatpush1.bf16.msra.mxu0 %v311
    %367 = vmatprep.subr.bf16.mxu0 %v316
    %368 = vmatpush1.bf16.msra.mxu0 %v315
    %369 = vmatprep.subr.bf16.mxu0 %v320
    %370 = vmatpush1.bf16.msra.mxu0 %v319
    %371 = vmatprep.subr.bf16.mxu0 0
    %372 = vmatpush1.bf16.msra.mxu0 0
    %373 = vmatprep.subr.bf16.mxu0 0
    %374 = vmatpush1.bf16.msra.mxu0 0
    %375 = vmatprep.subr.bf16.mxu0 0
    %376 = vmatpush1.bf16.msra.mxu0 0
    %377 = vmatprep.subr.bf16.mxu0 0
    %378 = vmatpush1.bf16.msra.mxu0 0
    %379 = vmatprep.subr.bf16.mxu0 0
    %380 = vmatpush1.bf16.msra.mxu0 0
    %381 = vmatprep.subr.bf16.mxu0 0
    %382 = vmatpush1.bf16.msra.mxu0 0
    %383 = vmatprep.subr.bf16.mxu0 0
    %384 = vmatpush1.bf16.msra.mxu0 0
    %385 = vmatprep.subr.bf16.mxu0 0
    %386 = vmatpush1.bf16.msra.mxu0 0
    %387 = vmatprep.mubr.bf16.mxu0 0
    %388 = vmatmul.mubr.bf16.gmra.mrb[0].mxu0 %v187
    %v389 = vpop.f32.mrb[0].mxu0
    %v390 = vadd.f32 %v154, %v389
    %v391 = vpop.f32.mrb[0].mxu0
    %v392 = vadd.f32 %v158, %v391
    %v393 = vpop.f32.mrb[0].mxu0
    %v394 = vadd.f32 %v154, %v393
    %v395 = vpop.f32.mrb[0].mxu0
    %v396 = vadd.f32 %v158, %v395
    %397 = vmatprep.mubr.bf16.mxu0 0
    %398 = vmatmul.mubr.bf16.gmra.mrb[0].mxu0 %v188
    %v399 = vpop.f32.mrb[0].mxu0
    %v400 = vadd.f32 %v154, %v399
    %v401 = vpop.f32.mrb[0].mxu0
    %v402 = vadd.f32 %v158, %v401
    %v403 = vpop.f32.mrb[0].mxu0
    %v404 = vadd.f32 %v154, %v403
    %v405 = vpop.f32.mrb[0].mxu0
    %v406 = vadd.f32 %v158, %v405
    %407 = vmatprep.mubr.bf16.mxu0 0
    %408 = vmatmul.mubr.bf16.gmra.mrb[0].mxu0 %v189
    %v409 = vpop.f32.mrb[0].mxu0
    %v410 = vadd.f32 %v154, %v409
    %v411 = vpop.f32.mrb[0].mxu0
    %v412 = vadd.f32 %v158, %v411
    %v413 = vpop.f32.mrb[0].mxu0
    %v414 = vadd.f32 %v154, %v413
    %v415 = vpop.f32.mrb[0].mxu0
    %v416 = vadd.f32 %v158, %v415
    %417 = vmatprep.mubr.bf16.mxu0 0
    %418 = vmatmul.mubr.bf16.gmra.mrb[0].mxu0 %v190
    %v419 = vpop.f32.mrb[0].mxu0
    %v420 = vadd.f32 %v154, %v419
    %v421 = vpop.f32.mrb[0].mxu0
    %v422 = vadd.f32 %v158, %v421
    %v423 = vpop.f32.mrb[0].mxu0
    %v424 = vadd.f32 %v154, %v423
    %v425 = vpop.f32.mrb[0].mxu0
    %v426 = vadd.f32 %v158, %v425
    %427 = vdwg.mxu0
    %428 = vmatprep.subr.bf16.mxu0 %v294
    %429 = vmatpush1.bf16.msra.mxu0 %v293
    %430 = vmatprep.subr.bf16.mxu0 %v298
    %431 = vmatpush1.bf16.msra.mxu0 %v297
    %432 = vmatprep.subr.bf16.mxu0 %v302
    %433 = vmatpush1.bf16.msra.mxu0 %v301
    %434 = vmatprep.subr.bf16.mxu0 %v306
    %435 = vmatpush1.bf16.msra.mxu0 %v305
    %436 = vmatprep.subr.bf16.mxu0 %v310
    %437 = vmatpush1.bf16.msra.mxu0 %v309
    %438 = vmatprep.subr.bf16.mxu0 %v314
    %439 = vmatpush1.bf16.msra.mxu0 %v313
    %440 = vmatprep.subr.bf16.mxu0 %v318
    %441 = vmatpush1.bf16.msra.mxu0 %v317
    %442 = vmatprep.subr.bf16.mxu0 %v322
    %443 = vmatpush1.bf16.msra.mxu0 %v321
    %444 = vmatprep.subr.bf16.mxu0 0
    %445 = vmatpush1.bf16.msra.mxu0 0
    %446 = vmatprep.subr.bf16.mxu0 0
    %447 = vmatpush1.bf16.msra.mxu0 0
    %448 = vmatprep.subr.bf16.mxu0 0
    %449 = vmatpush1.bf16.msra.mxu0 0
    %450 = vmatprep.subr.bf16.mxu0 0
    %451 = vmatpush1.bf16.msra.mxu0 0
    %452 = vmatprep.subr.bf16.mxu0 0
    %453 = vmatpush1.bf16.msra.mxu0 0
    %454 = vmatprep.subr.bf16.mxu0 0
    %455 = vmatpush1.bf16.msra.mxu0 0
    %456 = vmatprep.subr.bf16.mxu0 0
    %457 = vmatpush1.bf16.msra.mxu0 0
    %458 = vmatprep.subr.bf16.mxu0 0
    %459 = vmatpush1.bf16.msra.mxu0 0
    %460 = vmatprep.mubr.bf16.mxu0 0
    %461 = vmatmul.mubr.bf16.gmra.mrb[0].mxu0 %v187
    %v462 = vpop.f32.mrb[0].mxu0
    %v463 = vadd.f32 %v162, %v462
    %v464 = vpop.f32.mrb[0].mxu0
    %v465 = vadd.f32 %v166, %v464
    %v466 = vpop.f32.mrb[0].mxu0
    %v467 = vadd.f32 %v162, %v466
    %v468 = vpop.f32.mrb[0].mxu0
    %v469 = vadd.f32 %v166, %v468
    %470 = vmatprep.mubr.bf16.mxu0 0
    %471 = vmatmul.mubr.bf16.gmra.mrb[0].mxu0 %v188
    %v472 = vpop.f32.mrb[0].mxu0
    %v473 = vadd.f32 %v162, %v472
    %v474 = vpop.f32.mrb[0].mxu0
    %v475 = vadd.f32 %v166, %v474
    %v476 = vpop.f32.mrb[0].mxu0
    %v477 = vadd.f32 %v162, %v476
    %v478 = vpop.f32.mrb[0].mxu0
    %v479 = vadd.f32 %v166, %v478
    %480 = vmatprep.mubr.bf16.mxu0 0
    %481 = vmatmul.mubr.bf16.gmra.mrb[0].mxu0 %v189
    %v482 = vpop.f32.mrb[0].mxu0
    %v483 = vadd.f32 %v162, %v482
    %v484 = vpop.f32.mrb[0].mxu0
    %v485 = vadd.f32 %v166, %v484
    %v486 = vpop.f32.mrb[0].mxu0
    %v487 = vadd.f32 %v162, %v486
    %v488 = vpop.f32.mrb[0].mxu0
    %v489 = vadd.f32 %v166, %v488
    %490 = vmatprep.mubr.bf16.mxu0 0
    %491 = vmatmul.mubr.bf16.gmra.mrb[0].mxu0 %v190
    %v492 = vpop.f32.mrb[0].mxu0
    %v493 = vadd.f32 %v162, %v492
    %v494 = vpop.f32.mrb[0].mxu0
    %v495 = vadd.f32 %v166, %v494
    %v496 = vpop.f32.mrb[0].mxu0
    %v497 = vadd.f32 %v162, %v496
    %v498 = vpop.f32.mrb[0].mxu0
    %v499 = vadd.f32 %v166, %v498
    %500 = vdwg.mxu0
    %501 = vst [vmem:[#allocation2] sm:$0xff] %v390
    %502 = vst [vmem:[#allocation2 + $0x8] sm:$0xff] %v392
    %503 = vst [vmem:[#allocation2 + $0x10] sm:$0xff] %v463
    %504 = vst [vmem:[#allocation2 + $0x18] sm:$0xff] %v465
    %505 = vst [vmem:[#allocation2 + $0x20] sm:$0xff] %v394
    %506 = vst [vmem:[#allocation2 + $0x28] sm:$0xff] %v396
    %507 = vst [vmem:[#allocation2 + $0x30] sm:$0xff] %v467
    %508 = vst [vmem:[#allocation2 + $0x38] sm:$0xff] %v469
    %509 = vst [vmem:[#allocation2 + $0x40] sm:$0xff] %v400
    %510 = vst [vmem:[#allocation2 + $0x48] sm:$0xff] %v402
    %511 = vst [vmem:[#allocation2 + $0x50] sm:$0xff] %v473
    %512 = vst [vmem:[#allocation2 + $0x58] sm:$0xff] %v475
    %513 = vst [vmem:[#allocation2 + $0x60] sm:$0xff] %v404
    %514 = vst [vmem:[#allocation2 + $0x68] sm:$0xff] %v406
    %515 = vst [vmem:[#allocation2 + $0x70] sm:$0xff] %v477
    %516 = vst [vmem:[#allocation2 + $0x78] sm:$0xff] %v479
    %517 = vst [vmem:[#allocation2 + $0x80] sm:$0xff] %v410
    %518 = vst [vmem:[#allocation2 + $0x88] sm:$0xff] %v412
    %519 = vst [vmem:[#allocation2 + $0x90] sm:$0xff] %v483
    %520 = vst [vmem:[#allocation2 + $0x98] sm:$0xff] %v485
    %521 = vst [vmem:[#allocation2 + $0xa0] sm:$0xff] %v414
    %522 = vst [vmem:[#allocation2 + $0xa8] sm:$0xff] %v416
    %523 = vst [vmem:[#allocation2 + $0xb0] sm:$0xff] %v487
    %524 = vst [vmem:[#allocation2 + $0xb8] sm:$0xff] %v489
    %525 = vst [vmem:[#allocation2 + $0xc0] sm:$0xff] %v420
    %526 = vst [vmem:[#allocation2 + $0xc8] sm:$0xff] %v422
    %527 = vst [vmem:[#allocation2 + $0xd0] sm:$0xff] %v493
    %528 = vst [vmem:[#allocation2 + $0xd8] sm:$0xff] %v495
    %529 = vst [vmem:[#allocation2 + $0xe0] sm:$0xff] %v424
    %530 = vst [vmem:[#allocation2 + $0xe8] sm:$0xff] %v426
    %531 = vst [vmem:[#allocation2 + $0xf0] sm:$0xff] %v497
    %532 = vst [vmem:[#allocation2 + $0xf8] sm:$0xff] %v499
    %v533 = vld [vmem:[#allocation10] sm:$0xff]
    %v534 = vld [vmem:[#allocation10 + $0x8] sm:$0xff]
    %v535 = vld [vmem:[#allocation10 + $0x10] sm:$0xff]
    %v536 = vld [vmem:[#allocation10 + $0x18] sm:$0xff]
    %v537 = vld [vmem:[#allocation10 + $0x20] sm:$0xff]
    %v538 = vld [vmem:[#allocation10 + $0x28] sm:$0xff]
    %v539 = vld [vmem:[#allocation10 + $0x30] sm:$0xff]
    %v540 = vld [vmem:[#allocation10 + $0x38] sm:$0xff]
    %v541 = vld [vmem:[#allocation10 + $0x40] sm:$0xff]
    %v542 = vld [vmem:[#allocation10 + $0x48] sm:$0xff]
    %v543 = vld [vmem:[#allocation10 + $0x50] sm:$0xff]
    %v544 = vld [vmem:[#allocation10 + $0x58] sm:$0xff]
    %v545 = vld [vmem:[#allocation10 + $0x60] sm:$0xff]
    %v546 = vld [vmem:[#allocation10 + $0x68] sm:$0xff]
    %v547 = vld [vmem:[#allocation10 + $0x70] sm:$0xff]
    %v548 = vld [vmem:[#allocation10 + $0x78] sm:$0xff]
    %v549 = vld [vmem:[#allocation10 + $0x80] sm:$0xff]
    %v550 = vld [vmem:[#allocation10 + $0x88] sm:$0xff]
    %v551 = vld [vmem:[#allocation10 + $0x90] sm:$0xff]
    %v552 = vld [vmem:[#allocation10 + $0x98] sm:$0xff]
    %v553 = vld [vmem:[#allocation10 + $0xa0] sm:$0xff]
    %v554 = vld [vmem:[#allocation10 + $0xa8] sm:$0xff]
    %v555 = vld [vmem:[#allocation10 + $0xb0] sm:$0xff]
    %v556 = vld [vmem:[#allocation10 + $0xb8] sm:$0xff]
    %v557 = vld [vmem:[#allocation10 + $0xc0] sm:$0xff]
    %v558 = vld [vmem:[#allocation10 + $0xc8] sm:$0xff]
    %v559 = vld [vmem:[#allocation10 + $0xd0] sm:$0xff]
    %v560 = vld [vmem:[#allocation10 + $0xd8] sm:$0xff]
    %v561 = vld [vmem:[#allocation10 + $0xe0] sm:$0xff]
    %v562 = vld [vmem:[#allocation10 + $0xe8] sm:$0xff]
    %v563 = vld [vmem:[#allocation10 + $0xf0] sm:$0xff]
    %v564 = vld [vmem:[#allocation10 + $0xf8] sm:$0xff]
    %v565 = vld [vmem:[#allocation3] sm:$0xff]
    %v566 = vld [vmem:[#allocation4] sm:$0xff]
    %s567 = smul.u32 0, 4
    %s568 = smul.addr %s567, 8
    %s569 = scalar_lea.vmem [#allocation2], %s568
    %v570 = vld [vmem:[%s569] sm:$0xff]
    %v571 = vld [vmem:[%s569 + $0x8] sm:$0xff]
    %v572 = vld [vmem:[%s569 + $0x10] sm:$0xff]
    %v573 = vld [vmem:[%s569 + $0x18] sm:$0xff]
    %v574 = vpack.c.bf16 %v565, %v565
    %v607 = vunpack.c.l.b16 %v533
    %v608 = vunpack.c.h.b16 %v533
    %v609 = vunpack.c.l.b16 %v534
    %v610 = vunpack.c.h.b16 %v534
    %v611 = vunpack.c.l.b16 %v535
    %v612 = vunpack.c.h.b16 %v535
    %v613 = vunpack.c.l.b16 %v536
    %v614 = vunpack.c.h.b16 %v536
    %v615 = vunpack.c.l.b16 %v537
    %v616 = vunpack.c.h.b16 %v537
    %v617 = vunpack.c.l.b16 %v538
    %v618 = vunpack.c.h.b16 %v538
    %v619 = vunpack.c.l.b16 %v539
    %v620 = vunpack.c.h.b16 %v539
    %v621 = vunpack.c.l.b16 %v540
    %v622 = vunpack.c.h.b16 %v540
    %v623 = vunpack.c.l.b16 %v541
    %v624 = vunpack.c.h.b16 %v541
    %v625 = vunpack.c.l.b16 %v542
    %v626 = vunpack.c.h.b16 %v542
    %v627 = vunpack.c.l.b16 %v543
    %v628 = vunpack.c.h.b16 %v543
    %v629 = vunpack.c.l.b16 %v544
    %v630 = vunpack.c.h.b16 %v544
    %v631 = vunpack.c.l.b16 %v545
    %v632 = vunpack.c.h.b16 %v545
    %v633 = vunpack.c.l.b16 %v546
    %v634 = vunpack.c.h.b16 %v546
    %v635 = vunpack.c.l.b16 %v547
    %v636 = vunpack.c.h.b16 %v547
    %v637 = vunpack.c.l.b16 %v548
    %v638 = vunpack.c.h.b16 %v548
    %v639 = vunpack.c.l.b16 %v549
    %v640 = vunpack.c.h.b16 %v549
    %v641 = vunpack.c.l.b16 %v550
    %v642 = vunpack.c.h.b16 %v550
    %v643 = vunpack.c.l.b16 %v551
    %v644 = vunpack.c.h.b16 %v551
    %v645 = vunpack.c.l.b16 %v552
    %v646 = vunpack.c.h.b16 %v552
    %v647 = vunpack.c.l.b16 %v553
    %v648 = vunpack.c.h.b16 %v553
    %v649 = vunpack.c.l.b16 %v554
    %v650 = vunpack.c.h.b16 %v554
    %v651 = vunpack.c.l.b16 %v555
    %v652 = vunpack.c.h.b16 %v555
    %v653 = vunpack.c.l.b16 %v556
    %v654 = vunpack.c.h.b16 %v556
    %v655 = vunpack.c.l.b16 %v557
    %v656 = vunpack.c.h.b16 %v557
    %v657 = vunpack.c.l.b16 %v558
    %v658 = vunpack.c.h.b16 %v558
    %v659 = vunpack.c.l.b16 %v559
    %v660 = vunpack.c.h.b16 %v559
    %v661 = vunpack.c.l.b16 %v560
    %v662 = vunpack.c.h.b16 %v560
    %v663 = vunpack.c.l.b16 %v561
    %v664 = vunpack.c.h.b16 %v561
    %v665 = vunpack.c.l.b16 %v562
    %v666 = vunpack.c.h.b16 %v562
    %v667 = vunpack.c.l.b16 %v563
    %v668 = vunpack.c.h.b16 %v563
    %v669 = vunpack.c.l.b16 %v564
    %v670 = vunpack.c.h.b16 %v564
    %v671 = vpack.c.b16 %v611, %v607
    %v672 = vpack.c.b16 %v612, %v608
    %v673 = vpack.c.b16 %v613, %v609
    %v674 = vpack.c.b16 %v614, %v610
    %v675 = vpack.c.b16 %v619, %v615
    %v676 = vpack.c.b16 %v620, %v616
    %v677 = vpack.c.b16 %v621, %v617
    %v678 = vpack.c.b16 %v622, %v618
    %v679 = vpack.c.b16 %v627, %v623
    %v680 = vpack.c.b16 %v628, %v624
    %v681 = vpack.c.b16 %v629, %v625
    %v682 = vpack.c.b16 %v630, %v626
    %v683 = vpack.c.b16 %v635, %v631
    %v684 = vpack.c.b16 %v636, %v632
    %v685 = vpack.c.b16 %v637, %v633
    %v686 = vpack.c.b16 %v638, %v634
    %v687 = vpack.c.b16 %v643, %v639
    %v688 = vpack.c.b16 %v644, %v640
    %v689 = vpack.c.b16 %v645, %v641
    %v690 = vpack.c.b16 %v646, %v642
    %v691 = vpack.c.b16 %v651, %v647
    %v692 = vpack.c.b16 %v652, %v648
    %v693 = vpack.c.b16 %v653, %v649
    %v694 = vpack.c.b16 %v654, %v650
    %v695 = vpack.c.b16 %v659, %v655
    %v696 = vpack.c.b16 %v660, %v656
    %v697 = vpack.c.b16 %v661, %v657
    %v698 = vpack.c.b16 %v662, %v658
    %v699 = vpack.c.b16 %v667, %v663
    %v700 = vpack.c.b16 %v668, %v664
    %v701 = vpack.c.b16 %v669, %v665
    %v702 = vpack.c.b16 %v670, %v666
    %735 = vmatprep.subr.bf16.mxu0 %v672
    %736 = vmatpush1.bf16.msra.mxu0 %v671
    %737 = vmatprep.subr.bf16.mxu0 %v676
    %738 = vmatpush1.bf16.msra.mxu0 %v675
    %739 = vmatprep.subr.bf16.mxu0 %v680
    %740 = vmatpush1.bf16.msra.mxu0 %v679
    %741 = vmatprep.subr.bf16.mxu0 %v684
    %742 = vmatpush1.bf16.msra.mxu0 %v683
    %743 = vmatprep.subr.bf16.mxu0 %v688
    %744 = vmatpush1.bf16.msra.mxu0 %v687
    %745 = vmatprep.subr.bf16.mxu0 %v692
    %746 = vmatpush1.bf16.msra.mxu0 %v691
    %747 = vmatprep.subr.bf16.mxu0 %v696
    %748 = vmatpush1.bf16.msra.mxu0 %v695
    %749 = vmatprep.subr.bf16.mxu0 %v700
    %750 = vmatpush1.bf16.msra.mxu0 %v699
    %751 = vmatprep.subr.bf16.mxu0 0
    %752 = vmatpush1.bf16.msra.mxu0 0
    %753 = vmatprep.subr.bf16.mxu0 0
    %754 = vmatpush1.bf16.msra.mxu0 0
    %755 = vmatprep.subr.bf16.mxu0 0
    %756 = vmatpush1.bf16.msra.mxu0 0
    %757 = vmatprep.subr.bf16.mxu0 0
    %758 = vmatpush1.bf16.msra.mxu0 0
    %759 = vmatprep.subr.bf16.mxu0 0
    %760 = vmatpush1.bf16.msra.mxu0 0
    %761 = vmatprep.subr.bf16.mxu0 0
    %762 = vmatpush1.bf16.msra.mxu0 0
    %763 = vmatprep.subr.bf16.mxu0 0
    %764 = vmatpush1.bf16.msra.mxu0 0
    %765 = vmatprep.subr.bf16.mxu0 0
    %766 = vmatpush1.bf16.msra.mxu0 0
    %767 = vmatprep.mubr.bf16.mxu0 0
    %768 = vmatmul.mubr.bf16.gmra.mrb[0].mxu0 %v574
    %v769 = vpop.f32.mrb[0].mxu0
    %v770 = vadd.f32 0.0, %v769
    %v771 = vpop.f32.mrb[0].mxu0
    %v772 = vadd.f32 0.0, %v771
    %v773 = vpop.f32.mrb[0].mxu0
    %v774 = vpop.f32.mrb[0].mxu0
    %775 = vdwg.mxu0
    %776 = vmatprep.subr.bf16.mxu0 %v674
    %777 = vmatpush1.bf16.msra.mxu0 %v673
    %778 = vmatprep.subr.bf16.mxu0 %v678
    %779 = vmatpush1.bf16.msra.mxu0 %v677
    %780 = vmatprep.subr.bf16.mxu0 %v682
    %781 = vmatpush1.bf16.msra.mxu0 %v681
    %782 = vmatprep.subr.bf16.mxu0 %v686
    %783 = vmatpush1.bf16.msra.mxu0 %v685
    %784 = vmatprep.subr.bf16.mxu0 %v690
    %785 = vmatpush1.bf16.msra.mxu0 %v689
    %786 = vmatprep.subr.bf16.mxu0 %v694
    %787 = vmatpush1.bf16.msra.mxu0 %v693
    %788 = vmatprep.subr.bf16.mxu0 %v698
    %789 = vmatpush1.bf16.msra.mxu0 %v697
    %790 = vmatprep.subr.bf16.mxu0 %v702
    %791 = vmatpush1.bf16.msra.mxu0 %v701
    %792 = vmatprep.subr.bf16.mxu0 0
    %793 = vmatpush1.bf16.msra.mxu0 0
    %794 = vmatprep.subr.bf16.mxu0 0
    %795 = vmatpush1.bf16.msra.mxu0 0
    %796 = vmatprep.subr.bf16.mxu0 0
    %797 = vmatpush1.bf16.msra.mxu0 0
    %798 = vmatprep.subr.bf16.mxu0 0
    %799 = vmatpush1.bf16.msra.mxu0 0
    %800 = vmatprep.subr.bf16.mxu0 0
    %801 = vmatpush1.bf16.msra.mxu0 0
    %802 = vmatprep.subr.bf16.mxu0 0
    %803 = vmatpush1.bf16.msra.mxu0 0
    %804 = vmatprep.subr.bf16.mxu0 0
    %805 = vmatpush1.bf16.msra.mxu0 0
    %806 = vmatprep.subr.bf16.mxu0 0
    %807 = vmatpush1.bf16.msra.mxu0 0
    %808 = vmatprep.mubr.bf16.mxu0 0
    %809 = vmatmul.mubr.bf16.gmra.mrb[0].mxu0 %v574
    %v810 = vpop.f32.mrb[0].mxu0
    %v811 = vadd.f32 0.0, %v810
    %v812 = vpop.f32.mrb[0].mxu0
    %v813 = vadd.f32 0.0, %v812
    %v814 = vpop.f32.mrb[0].mxu0
    %v815 = vpop.f32.mrb[0].mxu0
    %816 = vdwg.mxu0
    %v817 = vadd.f32 %v570, %v770
    %v818 = vadd.f32 %v571, %v772
    %v819 = vadd.f32 %v572, %v811
    %v820 = vadd.f32 %v573, %v813
    %v821 = vmul.f32 %v817, 0.5
    %v822 = vmul.f32 %v818, 0.5
    %v823 = vmul.f32 %v819, 0.5
    %v824 = vtanh.pop %v821
    %v825 = vtanh.pop %v822
    %v826 = vtanh.pop %v823
    %v827 = vmul.f32 %v824, 0.5
    %v828 = vmul.f32 %v825, 0.5
    %v829 = vmul.f32 %v826, 0.5
    %v830 = vadd.f32 %v827, 0.5
    %v831 = vadd.f32 %v828, 0.5
    %v832 = vadd.f32 %v829, 0.5
    %v833 = vtanh.pop %v820
    %v834 = vmul.f32 %v831, %v566
    %v835 = vmul.f32 %v830, %v833
    %v836 = vadd.f32 %v834, %v835
    %v837 = vtanh.pop %v836
    %v838 = vmul.f32 %v832, %v837
    %s839 = smul.u32 1, 4
    %s840 = smul.addr %s839, 8
    %s841 = scalar_lea.vmem [#allocation2], %s840
    %v842 = vld [vmem:[%s841] sm:$0xff]
    %v843 = vld [vmem:[%s841 + $0x8] sm:$0xff]
    %v844 = vld [vmem:[%s841 + $0x10] sm:$0xff]
    %v845 = vld [vmem:[%s841 + $0x18] sm:$0xff]
    %v846 = vpack.c.bf16 %v838, %v838
    %847 = vmatprep.subr.bf16.mxu0 %v672
    %848 = vmatpush1.bf16.msra.mxu0 %v671
    %849 = vmatprep.subr.bf16.mxu0 %v676
    %850 = vmatpush1.bf16.msra.mxu0 %v675
    %851 = vmatprep.subr.bf16.mxu0 %v680
    %852 = vmatpush1.bf16.msra.mxu0 %v679
    %853 = vmatprep.subr.bf16.mxu0 %v684
    %854 = vmatpush1.bf16.msra.mxu0 %v683
    %855 = vmatprep.subr.bf16.mxu0 %v688
    %856 = vmatpush1.bf16.msra.mxu0 %v687
    %857 = vmatprep.subr.bf16.mxu0 %v692
    %858 = vmatpush1.bf16.msra.mxu0 %v691
    %859 = vmatprep.subr.bf16.mxu0 %v696
    %860 = vmatpush1.bf16.msra.mxu0 %v695
    %861 = vmatprep.subr.bf16.mxu0 %v700
    %862 = vmatpush1.bf16.msra.mxu0 %v699
    %863 = vmatprep.subr.bf16.mxu0 0
    %864 = vmatpush1.bf16.msra.mxu0 0
    %865 = vmatprep.subr.bf16.mxu0 0
    %866 = vmatpush1.bf16.msra.mxu0 0
    %867 = vmatprep.subr.bf16.mxu0 0
    %868 = vmatpush1.bf16.msra.mxu0 0
    %869 = vmatprep.subr.bf16.mxu0 0
    %870 = vmatpush1.bf16.msra.mxu0 0
    %871 = vmatprep.subr.bf16.mxu0 0
    %872 = vmatpush1.bf16.msra.mxu0 0
    %873 = vmatprep.subr.bf16.mxu0 0
    %874 = vmatpush1.bf16.msra.mxu0 0
    %875 = vmatprep.subr.bf16.mxu0 0
    %876 = vmatpush1.bf16.msra.mxu0 0
    %877 = vmatprep.subr.bf16.mxu0 0
    %878 = vmatpush1.bf16.msra.mxu0 0
    %879 = vmatprep.mubr.bf16.mxu0 0
    %880 = vmatmul.mubr.bf16.gmra.mrb[0].mxu0 %v846
    %v881 = vpop.f32.mrb[0].mxu0
    %v882 = vadd.f32 0.0, %v881
    %v883 = vpop.f32.mrb[0].mxu0
    %v884 = vadd.f32 0.0, %v883
    %v885 = vpop.f32.mrb[0].mxu0
    %v886 = vpop.f32.mrb[0].mxu0
    %887 = vdwg.mxu0
    %888 = vmatprep.subr.bf16.mxu0 %v674
    %889 = vmatpush1.bf16.msra.mxu0 %v673
    %890 = vmatprep.subr.bf16.mxu0 %v678
    %891 = vmatpush1.bf16.msra.mxu0 %v677
    %892 = vmatprep.subr.bf16.mxu0 %v682
    %893 = vmatpush1.bf16.msra.mxu0 %v681
    %894 = vmatprep.subr.bf16.mxu0 %v686
    %895 = vmatpush1.bf16.msra.mxu0 %v685
    %896 = vmatprep.subr.bf16.mxu0 %v690
    %897 = vmatpush1.bf16.msra.mxu0 %v689
    %898 = vmatprep.subr.bf16.mxu0 %v694
    %899 = vmatpush1.bf16.msra.mxu0 %v693
    %900 = vmatprep.subr.bf16.mxu0 %v698
    %901 = vmatpush1.bf16.msra.mxu0 %v697
    %902 = vmatprep.subr.bf16.mxu0 %v702
    %903 = vmatpush1.bf16.msra.mxu0 %v701
    %904 = vmatprep.subr.bf16.mxu0 0
    %905 = vmatpush1.bf16.msra.mxu0 0
    %906 = vmatprep.subr.bf16.mxu0 0
    %907 = vmatpush1.bf16.msra.mxu0 0
    %908 = vmatprep.subr.bf16.mxu0 0
    %909 = vmatpush1.bf16.msra.mxu0 0
    %910 = vmatprep.subr.bf16.mxu0 0
    %911 = vmatpush1.bf16.msra.mxu0 0
    %912 = vmatprep.subr.bf16.mxu0 0
    %913 = vmatpush1.bf16.msra.mxu0 0
    %914 = vmatprep.subr.bf16.mxu0 0
    %915 = vmatpush1.bf16.msra.mxu0 0
    %916 = vmatprep.subr.bf16.mxu0 0
    %917 = vmatpush1.bf16.msra.mxu0 0
    %918 = vmatprep.subr.bf16.mxu0 0
    %919 = vmatpush1.bf16.msra.mxu0 0
    %920 = vmatprep.mubr.bf16.mxu0 0
    %921 = vmatmul.mubr.bf16.gmra.mrb[0].mxu0 %v846
    %v922 = vpop.f32.mrb[0].mxu0
    %v923 = vadd.f32 0.0, %v922
    %v924 = vpop.f32.mrb[0].mxu0
    %v925 = vadd.f32 0.0, %v924
    %v926 = vpop.f32.mrb[0].mxu0
    %v927 = vpop.f32.mrb[0].mxu0
    %928 = vdwg.mxu0
    %v929 = vadd.f32 %v842, %v882
    %v930 = vadd.f32 %v843, %v884
    %v931 = vadd.f32 %v844, %v923
    %v932 = vadd.f32 %v845, %v925
    %v933 = vmul.f32 %v929, 0.5
    %v934 = vmul.f32 %v930, 0.5
    %v935 = vmul.f32 %v931, 0.5
    %v936 = vtanh.pop %v933
    %v937 = vtanh.pop %v934
    %v938 = vtanh.pop %v935
    %v939 = vmul.f32 %v936, 0.5
    %v940 = vmul.f32 %v937, 0.5
    %v941 = vmul.f32 %v938, 0.5
    %v942 = vadd.f32 %v939, 0.5
    %v943 = vadd.f32 %v940, 0.5
    %v944 = vadd.f32 %v941, 0.5
    %v945 = vtanh.pop %v932
    %v946 = vmul.f32 %v943, %v836
    %v947 = vmul.f32 %v942, %v945
    %v948 = vadd.f32 %v946, %v947
    %v949 = vtanh.pop %v948
    %v950 = vmul.f32 %v944, %v949
    %s951 = smul.u32 2, 4
    %s952 = smul.addr %s951, 8
    %s953 = scalar_lea.vmem [#allocation2], %s952
    %v954 = vld [vmem:[%s953] sm:$0xff]
    %v955 = vld [vmem:[%s953 + $0x8] sm:$0xff]
    %v956 = vld [vmem:[%s953 + $0x10] sm:$0xff]
    %v957 = vld [vmem:[%s953 + $0x18] sm:$0xff]
    %v958 = vpack.c.bf16 %v950, %v950
    %959 = vmatprep.subr.bf16.mxu0 %v672
    %960 = vmatpush1.bf16.msra.mxu0 %v671
    %961 = vmatprep.subr.bf16.mxu0 %v676
    %962 = vmatpush1.bf16.msra.mxu0 %v675
    %963 = vmatprep.subr.bf16.mxu0 %v680
    %964 = vmatpush1.bf16.msra.mxu0 %v679
    %965 = vmatprep.subr.bf16.mxu0 %v684
    %966 = vmatpush1.bf16.msra.mxu0 %v683
    %967 = vmatprep.subr.bf16.mxu0 %v688
    %968 = vmatpush1.bf16.msra.mxu0 %v687
    %969 = vmatprep.subr.bf16.mxu0 %v692
    %970 = vmatpush1.bf16.msra.mxu0 %v691
    %971 = vmatprep.subr.bf16.mxu0 %v696
    %972 = vmatpush1.bf16.msra.mxu0 %v695
    %973 = vmatprep.subr.bf16.mxu0 %v700
    %974 = vmatpush1.bf16.msra.mxu0 %v699
    %975 = vmatprep.subr.bf16.mxu0 0
    %976 = vmatpush1.bf16.msra.mxu0 0
    %977 = vmatprep.subr.bf16.mxu0 0
    %978 = vmatpush1.bf16.msra.mxu0 0
    %979 = vmatprep.subr.bf16.mxu0 0
    %980 = vmatpush1.bf16.msra.mxu0 0
    %981 = vmatprep.subr.bf16.mxu0 0
    %982 = vmatpush1.bf16.msra.mxu0 0
    %983 = vmatprep.subr.bf16.mxu0 0
    %984 = vmatpush1.bf16.msra.mxu0 0
    %985 = vmatprep.subr.bf16.mxu0 0
    %986 = vmatpush1.bf16.msra.mxu0 0
    %987 = vmatprep.subr.bf16.mxu0 0
    %988 = vmatpush1.bf16.msra.mxu0 0
    %989 = vmatprep.subr.bf16.mxu0 0
    %990 = vmatpush1.bf16.msra.mxu0 0
    %991 = vmatprep.mubr.bf16.mxu0 0
    %992 = vmatmul.mubr.bf16.gmra.mrb[0].mxu0 %v958
    %v993 = vpop.f32.mrb[0].mxu0
    %v994 = vadd.f32 0.0, %v993
    %v995 = vpop.f32.mrb[0].mxu0
    %v996 = vadd.f32 0.0, %v995
    %v997 = vpop.f32.mrb[0].mxu0
    %v998 = vpop.f32.mrb[0].mxu0
    %999 = vdwg.mxu0
    %1000 = vmatprep.subr.bf16.mxu0 %v674
    %1001 = vmatpush1.bf16.msra.mxu0 %v673
    %1002 = vmatprep.subr.bf16.mxu0 %v678
    %1003 = vmatpush1.bf16.msra.mxu0 %v677
    %1004 = vmatprep.subr.bf16.mxu0 %v682
    %1005 = vmatpush1.bf16.msra.mxu0 %v681
    %1006 = vmatprep.subr.bf16.mxu0 %v686
    %1007 = vmatpush1.bf16.msra.mxu0 %v685
    %1008 = vmatprep.subr.bf16.mxu0 %v690
    %1009 = vmatpush1.bf16.msra.mxu0 %v689
    %1010 = vmatprep.subr.bf16.mxu0 %v694
    %1011 = vmatpush1.bf16.msra.mxu0 %v693
    %1012 = vmatprep.subr.bf16.mxu0 %v698
    %1013 = vmatpush1.bf16.msra.mxu0 %v697
    %1014 = vmatprep.subr.bf16.mxu0 %v702
    %1015 = vmatpush1.bf16.msra.mxu0 %v701
    %1016 = vmatprep.subr.bf16.mxu0 0
    %1017 = vmatpush1.bf16.msra.mxu0 0
    %1018 = vmatprep.subr.bf16.mxu0 0
    %1019 = vmatpush1.bf16.msra.mxu0 0
    %1020 = vmatprep.subr.bf16.mxu0 0
    %1021 = vmatpush1.bf16.msra.mxu0 0
    %1022 = vmatprep.subr.bf16.mxu0 0
    %1023 = vmatpush1.bf16.msra.mxu0 0
    %1024 = vmatprep.subr.bf16.mxu0 0
    %1025 = vmatpush1.bf16.msra.mxu0 0
    %1026 = vmatprep.subr.bf16.mxu0 0
    %1027 = vmatpush1.bf16.msra.mxu0 0
    %1028 = vmatprep.subr.bf16.mxu0 0
    %1029 = vmatpush1.bf16.msra.mxu0 0
    %1030 = vmatprep.subr.bf16.mxu0 0
    %1031 = vmatpush1.bf16.msra.mxu0 0
    %1032 = vmatprep.mubr.bf16.mxu0 0
    %1033 = vmatmul.mubr.bf16.gmra.mrb[0].mxu0 %v958
    %v1034 = vpop.f32.mrb[0].mxu0
    %v1035 = vadd.f32 0.0, %v1034
    %v1036 = vpop.f32.mrb[0].mxu0
    %v1037 = vadd.f32 0.0, %v1036
    %v1038 = vpop.f32.mrb[0].mxu0
    %v1039 = vpop.f32.mrb[0].mxu0
    %1040 = vdwg.mxu0
    %v1041 = vadd.f32 %v954, %v994
    %v1042 = vadd.f32 %v955, %v996
    %v1043 = vadd.f32 %v956, %v1035
    %v1044 = vadd.f32 %v957, %v1037
    %v1045 = vmul.f32 %v1041, 0.5
    %v1046 = vmul.f32 %v1042, 0.5
    %v1047 = vmul.f32 %v1043, 0.5
    %v1048 = vtanh.pop %v1045
    %v1049 = vtanh.pop %v1046
    %v1050 = vtanh.pop %v1047
    %v1051 = vmul.f32 %v1048, 0.5
    %v1052 = vmul.f32 %v1049, 0.5
    %v1053 = vmul.f32 %v1050, 0.5
    %v1054 = vadd.f32 %v1051, 0.5
    %v1055 = vadd.f32 %v1052, 0.5
    %v1056 = vadd.f32 %v1053, 0.5
    %v1057 = vtanh.pop %v1044
    %v1058 = vmul.f32 %v1055, %v948
    %v1059 = vmul.f32 %v1054, %v1057
    %v1060 = vadd.f32 %v1058, %v1059
    %v1061 = vtanh.pop %v1060
    %v1062 = vmul.f32 %v1056, %v1061
    %s1063 = smul.u32 3, 4
    %s1064 = smul.addr %s1063, 8
    %s1065 = scalar_lea.vmem [#allocation2], %s1064
    %v1066 = vld [vmem:[%s1065] sm:$0xff]
    %v1067 = vld [vmem:[%s1065 + $0x8] sm:$0xff]
    %v1068 = vld [vmem:[%s1065 + $0x10] sm:$0xff]
    %v1069 = vld [vmem:[%s1065 + $0x18] sm:$0xff]
    %v1070 = vpack.c.bf16 %v1062, %v1062
    %1071 = vmatprep.subr.bf16.mxu0 %v672
    %1072 = vmatpush1.bf16.msra.mxu0 %v671
    %1073 = vmatprep.subr.bf16.mxu0 %v676
    %1074 = vmatpush1.bf16.msra.mxu0 %v675
    %1075 = vmatprep.subr.bf16.mxu0 %v680
    %1076 = vmatpush1.bf16.msra.mxu0 %v679
    %1077 = vmatprep.subr.bf16.mxu0 %v684
    %1078 = vmatpush1.bf16.msra.mxu0 %v683
    %1079 = vmatprep.subr.bf16.mxu0 %v688
    %1080 = vmatpush1.bf16.msra.mxu0 %v687
    %1081 = vmatprep.subr.bf16.mxu0 %v692
    %1082 = vmatpush1.bf16.msra.mxu0 %v691
    %1083 = vmatprep.subr.bf16.mxu0 %v696
    %1084 = vmatpush1.bf16.msra.mxu0 %v695
    %1085 = vmatprep.subr.bf16.mxu0 %v700
    %1086 = vmatpush1.bf16.msra.mxu0 %v699
    %1087 = vmatprep.subr.bf16.mxu0 0
    %1088 = vmatpush1.bf16.msra.mxu0 0
    %1089 = vmatprep.subr.bf16.mxu0 0
    %1090 = vmatpush1.bf16.msra.mxu0 0
    %1091 = vmatprep.subr.bf16.mxu0 0
    %1092 = vmatpush1.bf16.msra.mxu0 0
    %1093 = vmatprep.subr.bf16.mxu0 0
    %1094 = vmatpush1.bf16.msra.mxu0 0
    %1095 = vmatprep.subr.bf16.mxu0 0
    %1096 = vmatpush1.bf16.msra.mxu0 0
    %1097 = vmatprep.subr.bf16.mxu0 0
    %1098 = vmatpush1.bf16.msra.mxu0 0
    %1099 = vmatprep.subr.bf16.mxu0 0
    %1100 = vmatpush1.bf16.msra.mxu0 0
    %1101 = vmatprep.subr.bf16.mxu0 0
    %1102 = vmatpush1.bf16.msra.mxu0 0
    %1103 = vmatprep.mubr.bf16.mxu0 0
    %1104 = vmatmul.mubr.bf16.gmra.mrb[0].mxu0 %v1070
    %v1105 = vpop.f32.mrb[0].mxu0
    %v1106 = vadd.f32 0.0, %v1105
    %v1107 = vpop.f32.mrb[0].mxu0
    %v1108 = vadd.f32 0.0, %v1107
    %v1109 = vpop.f32.mrb[0].mxu0
    %v1110 = vpop.f32.mrb[0].mxu0
    %1111 = vdwg.mxu0
    %1112 = vmatprep.subr.bf16.mxu0 %v674
    %1113 = vmatpush1.bf16.msra.mxu0 %v673
    %1114 = vmatprep.subr.bf16.mxu0 %v678
    %1115 = vmatpush1.bf16.msra.mxu0 %v677
    %1116 = vmatprep.subr.bf16.mxu0 %v682
    %1117 = vmatpush1.bf16.msra.mxu0 %v681
    %1118 = vmatprep.subr.bf16.mxu0 %v686
    %1119 = vmatpush1.bf16.msra.mxu0 %v685
    %1120 = vmatprep.subr.bf16.mxu0 %v690
    %1121 = vmatpush1.bf16.msra.mxu0 %v689
    %1122 = vmatprep.subr.bf16.mxu0 %v694
    %1123 = vmatpush1.bf16.msra.mxu0 %v693
    %1124 = vmatprep.subr.bf16.mxu0 %v698
    %1125 = vmatpush1.bf16.msra.mxu0 %v697
    %1126 = vmatprep.subr.bf16.mxu0 %v702
    %1127 = vmatpush1.bf16.msra.mxu0 %v701
    %1128 = vmatprep.subr.bf16.mxu0 0
    %1129 = vmatpush1.bf16.msra.mxu0 0
    %1130 = vmatprep.subr.bf16.mxu0 0
    %1131 = vmatpush1.bf16.msra.mxu0 0
    %1132 = vmatprep.subr.bf16.mxu0 0
    %1133 = vmatpush1.bf16.msra.mxu0 0
    %1134 = vmatprep.subr.bf16.mxu0 0
    %1135 = vmatpush1.bf16.msra.mxu0 0
    %1136 = vmatprep.subr.bf16.mxu0 0
    %1137 = vmatpush1.bf16.msra.mxu0 0
    %1138 = vmatprep.subr.bf16.mxu0 0
    %1139 = vmatpush1.bf16.msra.mxu0 0
    %1140 = vmatprep.subr.bf16.mxu0 0
    %1141 = vmatpush1.bf16.msra.mxu0 0
    %1142 = vmatprep.subr.bf16.mxu0 0
    %1143 = vmatpush1.bf16.msra.mxu0 0
    %1144 = vmatprep.mubr.bf16.mxu0 0
    %1145 = vmatmul.mubr.bf16.gmra.mrb[0].mxu0 %v1070
    %v1146 = vpop.f32.mrb[0].mxu0
    %v1147 = vadd.f32 0.0, %v1146
    %v1148 = vpop.f32.mrb[0].mxu0
    %v1149 = vadd.f32 0.0, %v1148
    %v1150 = vpop.f32.mrb[0].mxu0
    %v1151 = vpop.f32.mrb[0].mxu0
    %1152 = vdwg.mxu0
    %v1153 = vadd.f32 %v1066, %v1106
    %v1154 = vadd.f32 %v1067, %v1108
    %v1155 = vadd.f32 %v1068, %v1147
    %v1156 = vadd.f32 %v1069, %v1149
    %v1157 = vmul.f32 %v1153, 0.5
    %v1158 = vmul.f32 %v1154, 0.5
    %v1159 = vmul.f32 %v1155, 0.5
    %v1160 = vtanh.pop %v1157
    %v1161 = vtanh.pop %v1158
    %v1162 = vtanh.pop %v1159
    %v1163 = vmul.f32 %v1160, 0.5
    %v1164 = vmul.f32 %v1161, 0.5
    %v1165 = vmul.f32 %v1162, 0.5
    %v1166 = vadd.f32 %v1163, 0.5
    %v1167 = vadd.f32 %v1164, 0.5
    %v1168 = vadd.f32 %v1165, 0.5
    %v1169 = vtanh.pop %v1156
    %v1170 = vmul.f32 %v1167, %v1060
    %v1171 = vmul.f32 %v1166, %v1169
    %v1172 = vadd.f32 %v1170, %v1171
    %v1173 = vtanh.pop %v1172
    %v1174 = vmul.f32 %v1168, %v1173
    %s1175 = smul.u32 4, 4
    %s1176 = smul.addr %s1175, 8
    %s1177 = scalar_lea.vmem [#allocation2], %s1176
    %v1178 = vld [vmem:[%s1177] sm:$0xff]
    %v1179 = vld [vmem:[%s1177 + $0x8] sm:$0xff]
    %v1180 = vld [vmem:[%s1177 + $0x10] sm:$0xff]
    %v1181 = vld [vmem:[%s1177 + $0x18] sm:$0xff]
    %v1182 = vpack.c.bf16 %v1174, %v1174
    %1183 = vmatprep.subr.bf16.mxu0 %v672
    %1184 = vmatpush1.bf16.msra.mxu0 %v671
    %1185 = vmatprep.subr.bf16.mxu0 %v676
    %1186 = vmatpush1.bf16.msra.mxu0 %v675
    %1187 = vmatprep.subr.bf16.mxu0 %v680
    %1188 = vmatpush1.bf16.msra.mxu0 %v679
    %1189 = vmatprep.subr.bf16.mxu0 %v684
    %1190 = vmatpush1.bf16.msra.mxu0 %v683
    %1191 = vmatprep.subr.bf16.mxu0 %v688
    %1192 = vmatpush1.bf16.msra.mxu0 %v687
    %1193 = vmatprep.subr.bf16.mxu0 %v692
    %1194 = vmatpush1.bf16.msra.mxu0 %v691
    %1195 = vmatprep.subr.bf16.mxu0 %v696
    %1196 = vmatpush1.bf16.msra.mxu0 %v695
    %1197 = vmatprep.subr.bf16.mxu0 %v700
    %1198 = vmatpush1.bf16.msra.mxu0 %v699
    %1199 = vmatprep.subr.bf16.mxu0 0
    %1200 = vmatpush1.bf16.msra.mxu0 0
    %1201 = vmatprep.subr.bf16.mxu0 0
    %1202 = vmatpush1.bf16.msra.mxu0 0
    %1203 = vmatprep.subr.bf16.mxu0 0
    %1204 = vmatpush1.bf16.msra.mxu0 0
    %1205 = vmatprep.subr.bf16.mxu0 0
    %1206 = vmatpush1.bf16.msra.mxu0 0
    %1207 = vmatprep.subr.bf16.mxu0 0
    %1208 = vmatpush1.bf16.msra.mxu0 0
    %1209 = vmatprep.subr.bf16.mxu0 0
    %1210 = vmatpush1.bf16.msra.mxu0 0
    %1211 = vmatprep.subr.bf16.mxu0 0
    %1212 = vmatpush1.bf16.msra.mxu0 0
    %1213 = vmatprep.subr.bf16.mxu0 0
    %1214 = vmatpush1.bf16.msra.mxu0 0
    %1215 = vmatprep.mubr.bf16.mxu0 0
    %1216 = vmatmul.mubr.bf16.gmra.mrb[0].mxu0 %v1182
    %v1217 = vpop.f32.mrb[0].mxu0
    %v1218 = vadd.f32 0.0, %v1217
    %v1219 = vpop.f32.mrb[0].mxu0
    %v1220 = vadd.f32 0.0, %v1219
    %v1221 = vpop.f32.mrb[0].mxu0
    %v1222 = vpop.f32.mrb[0].mxu0
    %1223 = vdwg.mxu0
    %1224 = vmatprep.subr.bf16.mxu0 %v674
    %1225 = vmatpush1.bf16.msra.mxu0 %v673
    %1226 = vmatprep.subr.bf16.mxu0 %v678
    %1227 = vmatpush1.bf16.msra.mxu0 %v677
    %1228 = vmatprep.subr.bf16.mxu0 %v682
    %1229 = vmatpush1.bf16.msra.mxu0 %v681
    %1230 = vmatprep.subr.bf16.mxu0 %v686
    %1231 = vmatpush1.bf16.msra.mxu0 %v685
    %1232 = vmatprep.subr.bf16.mxu0 %v690
    %1233 = vmatpush1.bf16.msra.mxu0 %v689
    %1234 = vmatprep.subr.bf16.mxu0 %v694
    %1235 = vmatpush1.bf16.msra.mxu0 %v693
    %1236 = vmatprep.subr.bf16.mxu0 %v698
    %1237 = vmatpush1.bf16.msra.mxu0 %v697
    %1238 = vmatprep.subr.bf16.mxu0 %v702
    %1239 = vmatpush1.bf16.msra.mxu0 %v701
    %1240 = vmatprep.subr.bf16.mxu0 0
    %1241 = vmatpush1.bf16.msra.mxu0 0
    %1242 = vmatprep.subr.bf16.mxu0 0
    %1243 = vmatpush1.bf16.msra.mxu0 0
    %1244 = vmatprep.subr.bf16.mxu0 0
    %1245 = vmatpush1.bf16.msra.mxu0 0
    %1246 = vmatprep.subr.bf16.mxu0 0
    %1247 = vmatpush1.bf16.msra.mxu0 0
    %1248 = vmatprep.subr.bf16.mxu0 0
    %1249 = vmatpush1.bf16.msra.mxu0 0
    %1250 = vmatprep.subr.bf16.mxu0 0
    %1251 = vmatpush1.bf16.msra.mxu0 0
    %1252 = vmatprep.subr.bf16.mxu0 0
    %1253 = vmatpush1.bf16.msra.mxu0 0
    %1254 = vmatprep.subr.bf16.mxu0 0
    %1255 = vmatpush1.bf16.msra.mxu0 0
    %1256 = vmatprep.mubr.bf16.mxu0 0
    %1257 = vmatmul.mubr.bf16.gmra.mrb[0].mxu0 %v1182
    %v1258 = vpop.f32.mrb[0].mxu0
    %v1259 = vadd.f32 0.0, %v1258
    %v1260 = vpop.f32.mrb[0].mxu0
    %v1261 = vadd.f32 0.0, %v1260
    %v1262 = vpop.f32.mrb[0].mxu0
    %v1263 = vpop.f32.mrb[0].mxu0
    %1264 = vdwg.mxu0
    %v1265 = vadd.f32 %v1178, %v1218
    %v1266 = vadd.f32 %v1179, %v1220
    %v1267 = vadd.f32 %v1180, %v1259
    %v1268 = vadd.f32 %v1181, %v1261
    %v1269 = vmul.f32 %v1265, 0.5
    %v1270 = vmul.f32 %v1266, 0.5
    %v1271 = vmul.f32 %v1267, 0.5
    %v1272 = vtanh.pop %v1269
    %v1273 = vtanh.pop %v1270
    %v1274 = vtanh.pop %v1271
    %v1275 = vmul.f32 %v1272, 0.5
    %v1276 = vmul.f32 %v1273, 0.5
    %v1277 = vmul.f32 %v1274, 0.5
    %v1278 = vadd.f32 %v1275, 0.5
    %v1279 = vadd.f32 %v1276, 0.5
    %v1280 = vadd.f32 %v1277, 0.5
    %v1281 = vtanh.pop %v1268
    %v1282 = vmul.f32 %v1279, %v1172
    %v1283 = vmul.f32 %v1278, %v1281
    %v1284 = vadd.f32 %v1282, %v1283
    %v1285 = vtanh.pop %v1284
    %v1286 = vmul.f32 %v1280, %v1285
    %s1287 = smul.u32 5, 4
    %s1288 = smul.addr %s1287, 8
    %s1289 = scalar_lea.vmem [#allocation2], %s1288
    %v1290 = vld [vmem:[%s1289] sm:$0xff]
    %v1291 = vld [vmem:[%s1289 + $0x8] sm:$0xff]
    %v1292 = vld [vmem:[%s1289 + $0x10] sm:$0xff]
    %v1293 = vld [vmem:[%s1289 + $0x18] sm:$0xff]
    %v1294 = vpack.c.bf16 %v1286, %v1286
    %1295 = vmatprep.subr.bf16.mxu0 %v672
    %1296 = vmatpush1.bf16.msra.mxu0 %v671
    %1297 = vmatprep.subr.bf16.mxu0 %v676
    %1298 = vmatpush1.bf16.msra.mxu0 %v675
    %1299 = vmatprep.subr.bf16.mxu0 %v680
    %1300 = vmatpush1.bf16.msra.mxu0 %v679
    %1301 = vmatprep.subr.bf16.mxu0 %v684
    %1302 = vmatpush1.bf16.msra.mxu0 %v683
    %1303 = vmatprep.subr.bf16.mxu0 %v688
    %1304 = vmatpush1.bf16.msra.mxu0 %v687
    %1305 = vmatprep.subr.bf16.mxu0 %v692
    %1306 = vmatpush1.bf16.msra.mxu0 %v691
    %1307 = vmatprep.subr.bf16.mxu0 %v696
    %1308 = vmatpush1.bf16.msra.mxu0 %v695
    %1309 = vmatprep.subr.bf16.mxu0 %v700
    %1310 = vmatpush1.bf16.msra.mxu0 %v699
    %1311 = vmatprep.subr.bf16.mxu0 0
    %1312 = vmatpush1.bf16.msra.mxu0 0
    %1313 = vmatprep.subr.bf16.mxu0 0
    %1314 = vmatpush1.bf16.msra.mxu0 0
    %1315 = vmatprep.subr.bf16.mxu0 0
    %1316 = vmatpush1.bf16.msra.mxu0 0
    %1317 = vmatprep.subr.bf16.mxu0 0
    %1318 = vmatpush1.bf16.msra.mxu0 0
    %1319 = vmatprep.subr.bf16.mxu0 0
    %1320 = vmatpush1.bf16.msra.mxu0 0
    %1321 = vmatprep.subr.bf16.mxu0 0
    %1322 = vmatpush1.bf16.msra.mxu0 0
    %1323 = vmatprep.subr.bf16.mxu0 0
    %1324 = vmatpush1.bf16.msra.mxu0 0
    %1325 = vmatprep.subr.bf16.mxu0 0
    %1326 = vmatpush1.bf16.msra.mxu0 0
    %1327 = vmatprep.mubr.bf16.mxu0 0
    %1328 = vmatmul.mubr.bf16.gmra.mrb[0].mxu0 %v1294
    %v1329 = vpop.f32.mrb[0].mxu0
    %v1330 = vadd.f32 0.0, %v1329
    %v1331 = vpop.f32.mrb[0].mxu0
    %v1332 = vadd.f32 0.0, %v1331
    %v1333 = vpop.f32.mrb[0].mxu0
    %v1334 = vpop.f32.mrb[0].mxu0
    %1335 = vdwg.mxu0
    %1336 = vmatprep.subr.bf16.mxu0 %v674
    %1337 = vmatpush1.bf16.msra.mxu0 %v673
    %1338 = vmatprep.subr.bf16.mxu0 %v678
    %1339 = vmatpush1.bf16.msra.mxu0 %v677
    %1340 = vmatprep.subr.bf16.mxu0 %v682
    %1341 = vmatpush1.bf16.msra.mxu0 %v681
    %1342 = vmatprep.subr.bf16.mxu0 %v686
    %1343 = vmatpush1.bf16.msra.mxu0 %v685
    %1344 = vmatprep.subr.bf16.mxu0 %v690
    %1345 = vmatpush1.bf16.msra.mxu0 %v689
    %1346 = vmatprep.subr.bf16.mxu0 %v694
    %1347 = vmatpush1.bf16.msra.mxu0 %v693
    %1348 = vmatprep.subr.bf16.mxu0 %v698
    %1349 = vmatpush1.bf16.msra.mxu0 %v697
    %1350 = vmatprep.subr.bf16.mxu0 %v702
    %1351 = vmatpush1.bf16.msra.mxu0 %v701
    %1352 = vmatprep.subr.bf16.mxu0 0
    %1353 = vmatpush1.bf16.msra.mxu0 0
    %1354 = vmatprep.subr.bf16.mxu0 0
    %1355 = vmatpush1.bf16.msra.mxu0 0
    %1356 = vmatprep.subr.bf16.mxu0 0
    %1357 = vmatpush1.bf16.msra.mxu0 0
    %1358 = vmatprep.subr.bf16.mxu0 0
    %1359 = vmatpush1.bf16.msra.mxu0 0
    %1360 = vmatprep.subr.bf16.mxu0 0
    %1361 = vmatpush1.bf16.msra.mxu0 0
    %1362 = vmatprep.subr.bf16.mxu0 0
    %1363 = vmatpush1.bf16.msra.mxu0 0
    %1364 = vmatprep.subr.bf16.mxu0 0
    %1365 = vmatpush1.bf16.msra.mxu0 0
    %1366 = vmatprep.subr.bf16.mxu0 0
    %1367 = vmatpush1.bf16.msra.mxu0 0
    %1368 = vmatprep.mubr.bf16.mxu0 0
    %1369 = vmatmul.mubr.bf16.gmra.mrb[0].mxu0 %v1294
    %v1370 = vpop.f32.mrb[0].mxu0
    %v1371 = vadd.f32 0.0, %v1370
    %v1372 = vpop.f32.mrb[0].mxu0
    %v1373 = vadd.f32 0.0, %v1372
    %v1374 = vpop.f32.mrb[0].mxu0
    %v1375 = vpop.f32.mrb[0].mxu0
    %1376 = vdwg.mxu0
    %v1377 = vadd.f32 %v1290, %v1330
    %v1378 = vadd.f32 %v1291, %v1332
    %v1379 = vadd.f32 %v1292, %v1371
    %v1380 = vadd.f32 %v1293, %v1373
    %v1381 = vmul.f32 %v1377, 0.5
    %v1382 = vmul.f32 %v1378, 0.5
    %v1383 = vmul.f32 %v1379, 0.5
    %v1384 = vtanh.pop %v1381
    %v1385 = vtanh.pop %v1382
    %v1386 = vtanh.pop %v1383
    %v1387 = vmul.f32 %v1384, 0.5
    %v1388 = vmul.f32 %v1385, 0.5
    %v1389 = vmul.f32 %v1386, 0.5
    %v1390 = vadd.f32 %v1387, 0.5
    %v1391 = vadd.f32 %v1388, 0.5
    %v1392 = vadd.f32 %v1389, 0.5
    %v1393 = vtanh.pop %v1380
    %v1394 = vmul.f32 %v1391, %v1284
    %v1395 = vmul.f32 %v1390, %v1393
    %v1396 = vadd.f32 %v1394, %v1395
    %v1397 = vtanh.pop %v1396
    %v1398 = vmul.f32 %v1392, %v1397
    %s1399 = smul.u32 6, 4
    %s1400 = smul.addr %s1399, 8
    %s1401 = scalar_lea.vmem [#allocation2], %s1400
    %v1402 = vld [vmem:[%s1401] sm:$0xff]
    %v1403 = vld [vmem:[%s1401 + $0x8] sm:$0xff]
    %v1404 = vld [vmem:[%s1401 + $0x10] sm:$0xff]
    %v1405 = vld [vmem:[%s1401 + $0x18] sm:$0xff]
    %v1406 = vpack.c.bf16 %v1398, %v1398
    %1407 = vmatprep.subr.bf16.mxu0 %v672
    %1408 = vmatpush1.bf16.msra.mxu0 %v671
    %1409 = vmatprep.subr.bf16.mxu0 %v676
    %1410 = vmatpush1.bf16.msra.mxu0 %v675
    %1411 = vmatprep.subr.bf16.mxu0 %v680
    %1412 = vmatpush1.bf16.msra.mxu0 %v679
    %1413 = vmatprep.subr.bf16.mxu0 %v684
    %1414 = vmatpush1.bf16.msra.mxu0 %v683
    %1415 = vmatprep.subr.bf16.mxu0 %v688
    %1416 = vmatpush1.bf16.msra.mxu0 %v687
    %1417 = vmatprep.subr.bf16.mxu0 %v692
    %1418 = vmatpush1.bf16.msra.mxu0 %v691
    %1419 = vmatprep.subr.bf16.mxu0 %v696
    %1420 = vmatpush1.bf16.msra.mxu0 %v695
    %1421 = vmatprep.subr.bf16.mxu0 %v700
    %1422 = vmatpush1.bf16.msra.mxu0 %v699
    %1423 = vmatprep.subr.bf16.mxu0 0
    %1424 = vmatpush1.bf16.msra.mxu0 0
    %1425 = vmatprep.subr.bf16.mxu0 0
    %1426 = vmatpush1.bf16.msra.mxu0 0
    %1427 = vmatprep.subr.bf16.mxu0 0
    %1428 = vmatpush1.bf16.msra.mxu0 0
    %1429 = vmatprep.subr.bf16.mxu0 0
    %1430 = vmatpush1.bf16.msra.mxu0 0
    %1431 = vmatprep.subr.bf16.mxu0 0
    %1432 = vmatpush1.bf16.msra.mxu0 0
    %1433 = vmatprep.subr.bf16.mxu0 0
    %1434 = vmatpush1.bf16.msra.mxu0 0
    %1435 = vmatprep.subr.bf16.mxu0 0
    %1436 = vmatpush1.bf16.msra.mxu0 0
    %1437 = vmatprep.subr.bf16.mxu0 0
    %1438 = vmatpush1.bf16.msra.mxu0 0
    %1439 = vmatprep.mubr.bf16.mxu0 0
    %1440 = vmatmul.mubr.bf16.gmra.mrb[0].mxu0 %v1406
    %v1441 = vpop.f32.mrb[0].mxu0
    %v1442 = vadd.f32 0.0, %v1441
    %v1443 = vpop.f32.mrb[0].mxu0
    %v1444 = vadd.f32 0.0, %v1443
    %v1445 = vpop.f32.mrb[0].mxu0
    %v1446 = vpop.f32.mrb[0].mxu0
    %1447 = vdwg.mxu0
    %1448 = vmatprep.subr.bf16.mxu0 %v674
    %1449 = vmatpush1.bf16.msra.mxu0 %v673
    %1450 = vmatprep.subr.bf16.mxu0 %v678
    %1451 = vmatpush1.bf16.msra.mxu0 %v677
    %1452 = vmatprep.subr.bf16.mxu0 %v682
    %1453 = vmatpush1.bf16.msra.mxu0 %v681
    %1454 = vmatprep.subr.bf16.mxu0 %v686
    %1455 = vmatpush1.bf16.msra.mxu0 %v685
    %1456 = vmatprep.subr.bf16.mxu0 %v690
    %1457 = vmatpush1.bf16.msra.mxu0 %v689
    %1458 = vmatprep.subr.bf16.mxu0 %v694
    %1459 = vmatpush1.bf16.msra.mxu0 %v693
    %1460 = vmatprep.subr.bf16.mxu0 %v698
    %1461 = vmatpush1.bf16.msra.mxu0 %v697
    %1462 = vmatprep.subr.bf16.mxu0 %v702
    %1463 = vmatpush1.bf16.msra.mxu0 %v701
    %1464 = vmatprep.subr.bf16.mxu0 0
    %1465 = vmatpush1.bf16.msra.mxu0 0
    %1466 = vmatprep.subr.bf16.mxu0 0
    %1467 = vmatpush1.bf16.msra.mxu0 0
    %1468 = vmatprep.subr.bf16.mxu0 0
    %1469 = vmatpush1.bf16.msra.mxu0 0
    %1470 = vmatprep.subr.bf16.mxu0 0
    %1471 = vmatpush1.bf16.msra.mxu0 0
    %1472 = vmatprep.subr.bf16.mxu0 0
    %1473 = vmatpush1.bf16.msra.mxu0 0
    %1474 = vmatprep.subr.bf16.mxu0 0
    %1475 = vmatpush1.bf16.msra.mxu0 0
    %1476 = vmatprep.subr.bf16.mxu0 0
    %1477 = vmatpush1.bf16.msra.mxu0 0
    %1478 = vmatprep.subr.bf16.mxu0 0
    %1479 = vmatpush1.bf16.msra.mxu0 0
    %1480 = vmatprep.mubr.bf16.mxu0 0
    %1481 = vmatmul.mubr.bf16.gmra.mrb[0].mxu0 %v1406
    %v1482 = vpop.f32.mrb[0].mxu0
    %v1483 = vadd.f32 0.0, %v1482
    %v1484 = vpop.f32.mrb[0].mxu0
    %v1485 = vadd.f32 0.0, %v1484
    %v1486 = vpop.f32.mrb[0].mxu0
    %v1487 = vpop.f32.mrb[0].mxu0
    %1488 = vdwg.mxu0
    %v1489 = vadd.f32 %v1402, %v1442
    %v1490 = vadd.f32 %v1403, %v1444
    %v1491 = vadd.f32 %v1404, %v1483
    %v1492 = vadd.f32 %v1405, %v1485
    %v1493 = vmul.f32 %v1489, 0.5
    %v1494 = vmul.f32 %v1490, 0.5
    %v1495 = vmul.f32 %v1491, 0.5
    %v1496 = vtanh.pop %v1493
    %v1497 = vtanh.pop %v1494
    %v1498 = vtanh.pop %v1495
    %v1499 = vmul.f32 %v1496, 0.5
    %v1500 = vmul.f32 %v1497, 0.5
    %v1501 = vmul.f32 %v1498, 0.5
    %v1502 = vadd.f32 %v1499, 0.5
    %v1503 = vadd.f32 %v1500, 0.5
    %v1504 = vadd.f32 %v1501, 0.5
    %v1505 = vtanh.pop %v1492
    %v1506 = vmul.f32 %v1503, %v1396
    %v1507 = vmul.f32 %v1502, %v1505
    %v1508 = vadd.f32 %v1506, %v1507
    %v1509 = vtanh.pop %v1508
    %v1510 = vmul.f32 %v1504, %v1509
    %s1511 = smul.u32 7, 4
    %s1512 = smul.addr %s1511, 8
    %s1513 = scalar_lea.vmem [#allocation2], %s1512
    %v1514 = vld [vmem:[%s1513] sm:$0xff]
    %v1515 = vld [vmem:[%s1513 + $0x8] sm:$0xff]
    %v1516 = vld [vmem:[%s1513 + $0x10] sm:$0xff]
    %v1517 = vld [vmem:[%s1513 + $0x18] sm:$0xff]
    %v1518 = vpack.c.bf16 %v1510, %v1510
    %1519 = vmatprep.subr.bf16.mxu0 %v672
    %1520 = vmatpush1.bf16.msra.mxu0 %v671
    %1521 = vmatprep.subr.bf16.mxu0 %v676
    %1522 = vmatpush1.bf16.msra.mxu0 %v675
    %1523 = vmatprep.subr.bf16.mxu0 %v680
    %1524 = vmatpush1.bf16.msra.mxu0 %v679
    %1525 = vmatprep.subr.bf16.mxu0 %v684
    %1526 = vmatpush1.bf16.msra.mxu0 %v683
    %1527 = vmatprep.subr.bf16.mxu0 %v688
    %1528 = vmatpush1.bf16.msra.mxu0 %v687
    %1529 = vmatprep.subr.bf16.mxu0 %v692
    %1530 = vmatpush1.bf16.msra.mxu0 %v691
    %1531 = vmatprep.subr.bf16.mxu0 %v696
    %1532 = vmatpush1.bf16.msra.mxu0 %v695
    %1533 = vmatprep.subr.bf16.mxu0 %v700
    %1534 = vmatpush1.bf16.msra.mxu0 %v699
    %1535 = vmatprep.subr.bf16.mxu0 0
    %1536 = vmatpush1.bf16.msra.mxu0 0
    %1537 = vmatprep.subr.bf16.mxu0 0
    %1538 = vmatpush1.bf16.msra.mxu0 0
    %1539 = vmatprep.subr.bf16.mxu0 0
    %1540 = vmatpush1.bf16.msra.mxu0 0
    %1541 = vmatprep.subr.bf16.mxu0 0
    %1542 = vmatpush1.bf16.msra.mxu0 0
    %1543 = vmatprep.subr.bf16.mxu0 0
    %1544 = vmatpush1.bf16.msra.mxu0 0
    %1545 = vmatprep.subr.bf16.mxu0 0
    %1546 = vmatpush1.bf16.msra.mxu0 0
    %1547 = vmatprep.subr.bf16.mxu0 0
    %1548 = vmatpush1.bf16.msra.mxu0 0
    %1549 = vmatprep.subr.bf16.mxu0 0
    %1550 = vmatpush1.bf16.msra.mxu0 0
    %1551 = vmatprep.mubr.bf16.mxu0 0
    %1552 = vmatmul.mubr.bf16.gmra.mrb[0].mxu0 %v1518
    %v1553 = vpop.f32.mrb[0].mxu0
    %v1554 = vadd.f32 0.0, %v1553
    %v1555 = vpop.f32.mrb[0].mxu0
    %v1556 = vadd.f32 0.0, %v1555
    %v1557 = vpop.f32.mrb[0].mxu0
    %v1558 = vpop.f32.mrb[0].mxu0
    %1559 = vdwg.mxu0
    %1560 = vmatprep.subr.bf16.mxu0 %v674
    %1561 = vmatpush1.bf16.msra.mxu0 %v673
    %1562 = vmatprep.subr.bf16.mxu0 %v678
    %1563 = vmatpush1.bf16.msra.mxu0 %v677
    %1564 = vmatprep.subr.bf16.mxu0 %v682
    %1565 = vmatpush1.bf16.msra.mxu0 %v681
    %1566 = vmatprep.subr.bf16.mxu0 %v686
    %1567 = vmatpush1.bf16.msra.mxu0 %v685
    %1568 = vmatprep.subr.bf16.mxu0 %v690
    %1569 = vmatpush1.bf16.msra.mxu0 %v689
    %1570 = vmatprep.subr.bf16.mxu0 %v694
    %1571 = vmatpush1.bf16.msra.mxu0 %v693
    %1572 = vmatprep.subr.bf16.mxu0 %v698
    %1573 = vmatpush1.bf16.msra.mxu0 %v697
    %1574 = vmatprep.subr.bf16.mxu0 %v702
    %1575 = vmatpush1.bf16.msra.mxu0 %v701
    %1576 = vmatprep.subr.bf16.mxu0 0
    %1577 = vmatpush1.bf16.msra.mxu0 0
    %1578 = vmatprep.subr.bf16.mxu0 0
    %1579 = vmatpush1.bf16.msra.mxu0 0
    %1580 = vmatprep.subr.bf16.mxu0 0
    %1581 = vmatpush1.bf16.msra.mxu0 0
    %1582 = vmatprep.subr.bf16.mxu0 0
    %1583 = vmatpush1.bf16.msra.mxu0 0
    %1584 = vmatprep.subr.bf16.mxu0 0
    %1585 = vmatpush1.bf16.msra.mxu0 0
    %1586 = vmatprep.subr.bf16.mxu0 0
    %1587 = vmatpush1.bf16.msra.mxu0 0
    %1588 = vmatprep.subr.bf16.mxu0 0
    %1589 = vmatpush1.bf16.msra.mxu0 0
    %1590 = vmatprep.subr.bf16.mxu0 0
    %1591 = vmatpush1.bf16.msra.mxu0 0
    %1592 = vmatprep.mubr.bf16.mxu0 0
    %1593 = vmatmul.mubr.bf16.gmra.mrb[0].mxu0 %v1518
    %v1594 = vpop.f32.mrb[0].mxu0
    %v1595 = vadd.f32 0.0, %v1594
    %v1596 = vpop.f32.mrb[0].mxu0
    %v1597 = vadd.f32 0.0, %v1596
    %v1598 = vpop.f32.mrb[0].mxu0
    %v1599 = vpop.f32.mrb[0].mxu0
    %1600 = vdwg.mxu0
    %v1601 = vadd.f32 %v1514, %v1554
    %v1602 = vadd.f32 %v1515, %v1556
    %v1603 = vadd.f32 %v1516, %v1595
    %v1604 = vadd.f32 %v1517, %v1597
    %v1605 = vmul.f32 %v1601, 0.5
    %v1606 = vmul.f32 %v1602, 0.5
    %v1607 = vmul.f32 %v1603, 0.5
    %v1608 = vtanh.pop %v1605
    %v1609 = vtanh.pop %v1606
    %v1610 = vtanh.pop %v1607
    %v1611 = vmul.f32 %v1608, 0.5
    %v1612 = vmul.f32 %v1609, 0.5
    %v1613 = vmul.f32 %v1610, 0.5
    %v1614 = vadd.f32 %v1611, 0.5
    %v1615 = vadd.f32 %v1612, 0.5
    %v1616 = vadd.f32 %v1613, 0.5
    %v1617 = vtanh.pop %v1604
    %v1618 = vmul.f32 %v1615, %v1508
    %v1619 = vmul.f32 %v1614, %v1617
    %v1620 = vadd.f32 %v1618, %v1619
    %v1621 = vtanh.pop %v1620
    %v1622 = vmul.f32 %v1616, %v1621
    %1623 = vst [vmem:[#allocation3] sm:$0xff] %v1622
    %1624 = vst [vmem:[#allocation4] sm:$0xff] %v1620
    // Predicated region
    $region54: #{lstm_forward.1} parent=1 // pred_check
      %p1625 = pneg %p103
    $region55: #{lstm_forward.1} parent=1 // pred_check_branch
      %1627 = sbr.rel (%p1625) target = $region57
    $region56: #{lstm_forward.1} parent=1 // pred_region
      %v1628 = vpack.c.bf16 %v1622, %v1622
      %v1629 = vld [vmem:[#allocation13] sm:$0xf]
      %v1630 = vld [vmem:[#allocation13 + $0x4] sm:$0xf]
      %v1631 = vld [vmem:[#allocation13 + $0x8] sm:$0xf]
      %v1632 = vld [vmem:[#allocation13 + $0xc] sm:$0xf]
      %v1633 = vld [vmem:[#allocation13 + $0x10] sm:$0xf]
      %v1634 = vld [vmem:[#allocation13 + $0x14] sm:$0xf]
      %v1635 = vld [vmem:[#allocation13 + $0x18] sm:$0xf]
      %v1636 = vld [vmem:[#allocation13 + $0x1c] sm:$0xf]
      %v1637 = vld [vmem:[#allocation13 + $0x20] sm:$0xf]
      %v1638 = vld [vmem:[#allocation13 + $0x24] sm:$0xf]
      %v1639 = vld [vmem:[#allocation13 + $0x28] sm:$0xf]
      %v1640 = vld [vmem:[#allocation13 + $0x2c] sm:$0xf]
      %v1641 = vld [vmem:[#allocation13 + $0x30] sm:$0xf]
      %v1642 = vld [vmem:[#allocation13 + $0x34] sm:$0xf]
      %v1643 = vld [vmem:[#allocation13 + $0x38] sm:$0xf]
      %v1644 = vld [vmem:[#allocation13 + $0x3c] sm:$0xf]
      %v1645 = vld [vmem:[#allocation14] sm:$0x1]
      %v1647 = vlaneseq
      %v1648 = vshrl.u32 %v1647, 7
      %v1649 = vsub.s32 0, %v1648
      %v1650 = vrot.slane %v1645, %v1649
      %v1668 = vunpack.c.l.b16 %v1629
      %v1669 = vunpack.c.l.b16 %v1630
      %v1670 = vunpack.c.l.b16 %v1631
      %v1671 = vunpack.c.l.b16 %v1632
      %v1672 = vunpack.c.l.b16 %v1633
      %v1673 = vunpack.c.l.b16 %v1634
      %v1674 = vunpack.c.l.b16 %v1635
      %v1675 = vunpack.c.l.b16 %v1636
      %v1676 = vunpack.c.l.b16 %v1637
      %v1677 = vunpack.c.l.b16 %v1638
      %v1678 = vunpack.c.l.b16 %v1639
      %v1679 = vunpack.c.l.b16 %v1640
      %v1680 = vunpack.c.l.b16 %v1641
      %v1681 = vunpack.c.l.b16 %v1642
      %v1682 = vunpack.c.l.b16 %v1643
      %v1683 = vunpack.c.l.b16 %v1644
      %v1684 = vpack.c.b16 %v1669, %v1668
      %v1685 = vpack.c.b16 %v1671, %v1670
      %v1686 = vpack.c.b16 %v1673, %v1672
      %v1687 = vpack.c.b16 %v1675, %v1674
      %v1688 = vpack.c.b16 %v1677, %v1676
      %v1689 = vpack.c.b16 %v1679, %v1678
      %v1690 = vpack.c.b16 %v1681, %v1680
      %v1691 = vpack.c.b16 %v1683, %v1682
      %1700 = vmatprep.subr.bf16.mxu0 0
      %1701 = vmatpush1.bf16.msra.mxu0 %v1684
      %1702 = vmatprep.subr.bf16.mxu0 0
      %1703 = vmatpush1.bf16.msra.mxu0 %v1685
      %1704 = vmatprep.subr.bf16.mxu0 0
      %1705 = vmatpush1.bf16.msra.mxu0 %v1686
      %1706 = vmatprep.subr.bf16.mxu0 0
      %1707 = vmatpush1.bf16.msra.mxu0 %v1687
      %1708 = vmatprep.subr.bf16.mxu0 0
      %1709 = vmatpush1.bf16.msra.mxu0 %v1688
      %1710 = vmatprep.subr.bf16.mxu0 0
      %1711 = vmatpush1.bf16.msra.mxu0 %v1689
      %1712 = vmatprep.subr.bf16.mxu0 0
      %1713 = vmatpush1.bf16.msra.mxu0 %v1690
      %1714 = vmatprep.subr.bf16.mxu0 0
      %1715 = vmatpush1.bf16.msra.mxu0 %v1691
      %1716 = vmatprep.subr.bf16.mxu0 0
      %1717 = vmatpush1.bf16.msra.mxu0 0
      %1718 = vmatprep.subr.bf16.mxu0 0
      %1719 = vmatpush1.bf16.msra.mxu0 0
      %1720 = vmatprep.subr.bf16.mxu0 0
      %1721 = vmatpush1.bf16.msra.mxu0 0
      %1722 = vmatprep.subr.bf16.mxu0 0
      %1723 = vmatpush1.bf16.msra.mxu0 0
      %1724 = vmatprep.subr.bf16.mxu0 0
      %1725 = vmatpush1.bf16.msra.mxu0 0
      %1726 = vmatprep.subr.bf16.mxu0 0
      %1727 = vmatpush1.bf16.msra.mxu0 0
      %1728 = vmatprep.subr.bf16.mxu0 0
      %1729 = vmatpush1.bf16.msra.mxu0 0
      %1730 = vmatprep.subr.bf16.mxu0 0
      %1731 = vmatpush1.bf16.msra.mxu0 0
      %1732 = vmatprep.mubr.bf16.mxu0 0
      %1733 = vmatmul.mubr.bf16.gmra.mrb[0].mxu0 %v1628
      %v1734 = vpop.f32.mrb[0].mxu0
      %v1735 = vadd.f32 %v1650, %v1734
      %v1736 = vpop.f32.mrb[0].mxu0
      %v1737 = vpop.f32.mrb[0].mxu0
      %v1738 = vpop.f32.mrb[0].mxu0
      %1739 = vdwg.mxu0
      %1740 = vmax.xlane.f32.xlu0 %v1735
      %v1741 = vpop.xlane.xlu0 %1740
      %v1742 = vsub.f32 %v1735, %v1741
      %v1743 = vmul.f32 %v1742, 1.442695
      %v1744 = vpow.pop %v1743
      %1745 = vadd.xlane.f32.xlu0 %v1744
      %v1746 = vpop.xlane.xlu0 %1745
      %v1747 = vrcp.pop %v1746
      %v1748 = vmul.f32 %v1744, %v1747
      %1749 = vst [vmem:[#allocation16] sm:$0xff] %v1748
    $region57: #{lstm_forward.1} parent=1 // pred_fallthru
      _
    // Predicated region
    $region58: #{lstm_forward.1} parent=1 // pred_check
      _
    $region59: #{lstm_forward.1} parent=1 // pred_check_branch
      %1751 = sbr.rel (0) target = $region61
    $region60: #{lstm_forward.1} parent=1 // pred_region
      %s1753 = ssub.s32 128, 128
      %1754 = vsyncadd [#allocation7], %s1753
      %s1756 = sshll.u32 [#allocation16], 4
      %s1757 = int_to_ptr.vmem [resolvable:$true] %s1756
      %1759 = dma.vmem_to_hbm [thread:$0]  %s1757, 128, %s6, [#allocation7]
    $region61: #{lstm_forward.1} parent=1 // pred_fallthru
      _
    // Predicated region
    $region62: #{lstm_forward.1} parent=1 // pred_check
      _
    $region63: #{lstm_forward.1} parent=1 // pred_check_branch
      %1761 = sbr.rel (0) target = $region65
    $region64: #{lstm_forward.1} parent=1 // pred_region
      %1762 = dma.done [#allocation7], 128
    $region65: #{lstm_forward.1} parent=1 // pred_fallthru
      _
    %1763 = vsyncpa [#allocation6], 1
    %1764 = vsyncpa [#allocation9], 1
    %1765 = vsyncpa [#allocation12], 1
    %1766 = vsyncpa [#allocation15], 1
    %1767 = vsyncpa [#allocation7], 1

</llo_original>
